<compile_context>
chip_gen: v6e
topology: v6e:2x2x1
jax: 0.10.0
libtpu: 0.0.40
codegen_flags: <defaults>
</compile_context>

<pallas_src>
import functools

import jax
import jax.numpy as jnp
from jax.experimental import pallas as pl
from jax.experimental.pallas import tpu as pltpu

PATCH = 32  # densenet121 features at out_indices=[4] have stride 32


# ----------------------------------------------------------------------------
# Fused kernel: spatial patch-sum accumulation + (epilogue) embed matmul with
# the resident w_embed + lane-dense head matmul ([w_lat | w_cond] * 1/S slab).
# ----------------------------------------------------------------------------
def _rlca_fused_kernel(patches_ref, w_embed_ref, w_head_ref, out_ref, acc_ref):
    s = pl.program_id(1)

    @pl.when(s == 0)
    def _():
        acc_ref[...] = jnp.zeros_like(acc_ref)

    # Pool-first: sum the (tb, ts, P) bf16 tile over its spatial axis with an
    # f32 accumulator; no f32 copy of the tile is materialized.
    acc_ref[...] += jnp.sum(patches_ref[...], axis=1, dtype=jnp.float32)

    @pl.when(s == pl.num_programs(1) - 1)
    def _():
        pooled = acc_ref[...].astype(jnp.bfloat16)            # (tb, P)
        feat = jnp.dot(pooled, w_embed_ref[...],
                       preferred_element_type=jnp.float32)    # (tb, Cf)
        # One lane-dense 128-wide head slab [w_lat | w_cond | 0-pad], 1/S
        # already folded in -> single unmasked 128-lane store.
        head = jnp.dot(feat.astype(jnp.bfloat16), w_head_ref[...],
                       preferred_element_type=jnp.float32)    # (tb, LANES)
        out_ref[:, 0, :] = head


# ----------------------------------------------------------------------------
# Tiling heuristics
# ----------------------------------------------------------------------------
def _pick_ts(S, tb, P, bytes_per_elem, budget_bytes, cap=None):
    """Largest legal spatial tile: prefer multiples of 16 (bf16 packing)."""
    limit = min(S, cap) if cap is not None else S

    def fits(c):
        return tb * c * P * bytes_per_elem <= budget_bytes

    def legal(c):  # (8,128) rule on the block's second-to-last dim
        return c == S or c % 8 == 0

    for c in range(limit, 0, -1):
        if S % c == 0 and (c == S or c % 16 == 0) and fits(c):
            return c
    for c in range(limit, 0, -1):
        if S % c == 0 and legal(c) and fits(c):
            return c
    for c in range(limit, 0, -1):
        if S % c == 0 and legal(c):
            return c
    return S


# ----------------------------------------------------------------------------
# Wrapper
# ----------------------------------------------------------------------------
def rlca_net_forward(x, params, *, ts_cap=None, block_budget_bytes=8 << 20):
    """x: (B, 3, H, W) float32 NCHW. Returns (latent (B, L), probs (B, M, L))."""
    B, Cin, H, W = x.shape
    nH, nW = H // PATCH, W // PATCH
    S = nH * nW
    P = Cin * PATCH * PATCH

    w_embed = params["w_embed"]        # (P, Cf)
    w_lat = params["w_lat"]            # (Cf, L)  == latent_classifier.weight.T
    b_lat = params["b_lat"]            # (1, L)
    w_cond = params["w_cond"]          # (Cf, M)  == condition_classifier.weight.T
    intercept = params["intercept"]    # (M, L)
    Cf = w_embed.shape[1]
    L = w_lat.shape[1]
    M = w_cond.shape[1]
    LM = L + M
    LANES = max(128, ((LM + 127) // 128) * 128)

    assert H % PATCH == 0 and W % PATCH == 0
    assert P % 128 == 0 and Cf % 128 == 0, "keep embed dims lane-aligned"

    # --- glue: bf16 cast FIRST, then patchify (reshape/transpose) ---
    # TODO(synk): fold the patchify into the kernel (strip BlockSpec over raw x)
    # to avoid materializing the (B, S, P) array in HBM at all.
    patches = x.astype(jnp.bfloat16)
    patches = patches.reshape(B, Cin, nH, PATCH, nW, PATCH)
    patches = patches.transpose(0, 2, 4, 1, 3, 5).reshape(B, S, P)
    w_embed_bf = w_embed.astype(jnp.bfloat16)

    # Lane-dense head slab [w_lat | w_cond | 0-pad] with 1/S folded in (bf16).
    w_head = jnp.zeros((Cf, LANES), jnp.float32)
    w_head = w_head.at[:, :L].set(w_lat)
    w_head = w_head.at[:, L:LM].set(w_cond)
    w_head = (w_head * (1.0 / S)).astype(jnp.bfloat16)

    # --- tiling ---
    # >= 2 programs on the "parallel" batch axis when possible (v7x has 2 TCs;
    # no effect on v5e/v6e).  Output is (B, 1, LANES) so the block stays legal
    # for any tb.
    tb = B // 2 if (B >= 2 and B % 2 == 0) else B
    ts = _pick_ts(S, tb, P, 2, block_budget_bytes, cap=ts_cap)
    grid = (B // tb, S // ts)

    cost = pl.CostEstimate(
        flops=2 * B * P * Cf + B * S * P + 2 * B * Cf * LANES,
        transcendentals=0,
        bytes_accessed=(B * S * P * 2            # patches, streamed once
                        + P * Cf * 2             # resident w_embed, once
                        + Cf * LANES * 2         # resident head slab, once
                        + B * LANES * 4),        # output
    )

    out3 = pl.pallas_call(
        _rlca_fused_kernel,
        out_shape=jax.ShapeDtypeStruct((B, 1, LANES), jnp.float32),
        grid_spec=pltpu.PrefetchScalarGridSpec(
            num_scalar_prefetch=0,
            grid=grid,
            in_specs=[
                pl.BlockSpec((tb, ts, P), lambda b, s: (b, s, 0)),
                pl.BlockSpec((P, Cf), lambda b, s: (0, 0)),       # resident
                pl.BlockSpec((Cf, LANES), lambda b, s: (0, 0)),   # resident
            ],
            out_specs=pl.BlockSpec((tb, 1, LANES), lambda b, s: (b, 0, 0)),
            scratch_shapes=[pltpu.VMEM((tb, P), jnp.float32)],
        ),
        compiler_params=pltpu.CompilerParams(
            dimension_semantics=("parallel", "arbitrary"),
            vmem_limit_bytes=48 * 1024 * 1024,
        ),
        cost_estimate=cost,
    )(patches, w_embed_bf, w_head)

    # --- tiny epilogue in XLA (keeps the kernel output lane-dense) ---
    head_out = out3[:, 0, :]
    latent = head_out[:, :L] + b_lat                      # latent_classifier bias
    prob = head_out[:, L:LM]                              # condition_classifier
    probs = prob[:, :, None] + intercept[None, :, :]      # intercept broadcast
    return latent, probs


# ----------------------------------------------------------------------------
# Pure-JAX f32 reference (same math order as the PyTorch module)
# ----------------------------------------------------------------------------
def rlca_net_reference(x, params):
    B, Cin, H, W = x.shape
    nH, nW = H // PATCH, W // PATCH
    S = nH * nW
    patches = x.reshape(B, Cin, nH, PATCH, nW, PATCH)
    patches = patches.transpose(0, 2, 4, 1, 3, 5).reshape(B * S, -1)
    feat = patches @ params["w_embed"]                    # (B*S, Cf)
    feat = feat.reshape(B, S, -1)
    pooled = jnp.mean(feat, axis=1)                       # (B, Cf)
    latent = pooled @ params["w_lat"] + params["b_lat"]
    prob = pooled @ params["w_cond"]                      # (B, M)
    probs = prob[:, :, None] + params["intercept"][None, :, :]
    return latent, probs


if __name__ == "__main__":
    # Small, module-consistent shapes (stride-32 backbone -> 8x8 feature grid).
    # ts_cap=16 forces several spatial tiles so the accumulation path and the
    # 2-program parallel batch axis are both exercised: grid = (2, 4).
    B, Cin, H, W = 2, 3, 256, 256
    Cf = 256                       # stands in for densenet121's 1024 (lane-aligned)
    num_labels = 6                 # M
    num_latent_variable = 3        # L

    key = jax.random.PRNGKey(0)
    k_x, k_e, k_wl, k_bl, k_wc, k_ic = jax.random.split(key, 6)

    x = jax.random.normal(k_x, (B, Cin, H, W), dtype=jnp.float32)

    params = {
        "w_embed": 0.02 * jax.random.normal(
            k_e, (Cin * PATCH * PATCH, Cf), dtype=jnp.float32),
        "w_lat": 0.1 * jax.random.normal(
            k_wl, (Cf, num_latent_variable), dtype=jnp.float32),
        "b_lat": 0.1 * jax.random.normal(
            k_bl, (1, num_latent_variable), dtype=jnp.float32),
        "w_cond": 0.1 * jax.random.normal(
            k_wc, (Cf, num_labels), dtype=jnp.float32),
        # nn.Parameter(torch.zeros(M, L)) in __init__; random here so the
        # broadcast path is exercised deterministically.
        "intercept": 0.1 * jax.random.normal(
            k_ic, (num_labels, num_latent_variable), dtype=jnp.float32),
    }

    fwd = jax.jit(functools.partial(rlca_net_forward, ts_cap=16))
    latent, probs = jax.block_until_ready(fwd(x, params))
    latent_ref, probs_ref = rlca_net_reference(x, params)

    assert latent.shape == (B, num_latent_variable)
    assert probs.shape == (B, num_labels, num_latent_variable)
    # bf16 MXU inputs (f32 accumulate) -> loosen tolerance vs. the f32 reference.
    assert jnp.allclose(latent, latent_ref, atol=5e-2, rtol=5e-2), (
        float(jnp.max(jnp.abs(latent - latent_ref))))
    assert jnp.allclose(probs, probs_ref, atol=5e-2, rtol=5e-2), (
        float(jnp.max(jnp.abs(probs - probs_ref))))

    print("KERNEL_OK")
</pallas_src>

<mosaic_0001>
module attributes {stable_mosaic.version = 11 : i64} {
  func.func @_rlca_fused_kernel(%arg0: i32, %arg1: i32, %arg2: memref<1x16x3072xbf16, #tpu.memory_space<vmem>>, %arg3: memref<3072x256xbf16, #tpu.memory_space<vmem>>, %arg4: memref<256x128xbf16, #tpu.memory_space<vmem>>, %arg5: memref<1x1x128xf32, #tpu.memory_space<vmem>>, %arg6: memref<1x3072xf32, #tpu.memory_space<vmem>>) attributes {dimension_semantics = [#tpu.dimension_semantics<parallel>, #tpu.dimension_semantics<arbitrary>], iteration_bounds = array<i64: 2, 4>, scalar_prefetch = 0 : i64, scratch_operands = 1 : i64, tpu.core_type = #tpu.core_type<tc>, window_params = [{transform_indices = @transform_0, window_bounds = array<i64: 1, 16, 3072>}, {pipeline_mode = #tpu.pipeline_mode<synchronous>, transform_indices = @transform_1, window_bounds = array<i64: 3072, 256>}, {pipeline_mode = #tpu.pipeline_mode<synchronous>, transform_indices = @transform_2, window_bounds = array<i64: 256, 128>}, {transform_indices = @transform_3, window_bounds = array<i64: 1, 1, 128>}]} {
    %c0_i32 = arith.constant 0 : i32
    %0 = arith.cmpi eq, %arg1, %c0_i32 : i32
    %1 = arith.extui %0 : i1 to i32
    %c0_i32_0 = arith.constant 0 : i32
    %2 = arith.cmpi ne, %1, %c0_i32_0 : i32
    scf.if %2 {
      %cst_8 = arith.constant 0.000000e+00 : f32
      %12 = vector.broadcast %cst_8 : f32 to vector<1x3072xf32>
      %c0_9 = arith.constant 0 : index
      %c0_10 = arith.constant 0 : index
      %13 = vector.load %arg6[%c0_9, %c0_10] : memref<1x3072xf32, #tpu.memory_space<vmem>>, vector<1x3072xf32>
      tpu.vector_store %arg6[%c0_9, %c0_10], %12 {strides = array<i32>} : memref<1x3072xf32, #tpu.memory_space<vmem>>, vector<1x3072xf32>,
    } else {
    }
    %c0 = arith.constant 0 : index
    %c0_1 = arith.constant 0 : index
    %3 = vector.load %arg6[%c0, %c0_1] : memref<1x3072xf32, #tpu.memory_space<vmem>>, vector<1x3072xf32>
    %c0_2 = arith.constant 0 : index
    %c0_3 = arith.constant 0 : index
    %c0_4 = arith.constant 0 : index
    %4 = vector.load %arg2[%c0_2, %c0_3, %c0_4] : memref<1x16x3072xbf16, #tpu.memory_space<vmem>>, vector<1x16x3072xbf16>
    %5 = arith.extf %4 : vector<1x16x3072xbf16> to vector<1x16x3072xf32>
    %cst = arith.constant dense<0.000000e+00> : vector<1x3072xf32>
    %6 = vector.multi_reduction <add>, %5, %cst [1] : vector<1x16x3072xf32> to vector<1x3072xf32>
    %7 = arith.addf %3, %6 : vector<1x3072xf32>
    %c0_5 = arith.constant 0 : index
    %c0_6 = arith.constant 0 : index
    %8 = vector.load %arg6[%c0_5, %c0_6] : memref<1x3072xf32, #tpu.memory_space<vmem>>, vector<1x3072xf32>
    tpu.vector_store %arg6[%c0_5, %c0_6], %7 {strides = array<i32>} : memref<1x3072xf32, #tpu.memory_space<vmem>>, vector<1x3072xf32>,
    %c3_i32 = arith.constant 3 : i32
    %9 = arith.cmpi eq, %arg1, %c3_i32 : i32
    %10 = arith.extui %9 : i1 to i32
    %c0_i32_7 = arith.constant 0 : i32
    %11 = arith.cmpi ne, %10, %c0_i32_7 : i32
    scf.if %11 {
      %c0_8 = arith.constant 0 : index
      %c0_9 = arith.constant 0 : index
      %12 = vector.load %arg6[%c0_8, %c0_9] : memref<1x3072xf32, #tpu.memory_space<vmem>>, vector<1x3072xf32>
      %13 = arith.truncf %12 : vector<1x3072xf32> to vector<1x3072xbf16>
      %c0_10 = arith.constant 0 : index
      %c0_11 = arith.constant 0 : index
      %14 = vector.load %arg3[%c0_10, %c0_11] : memref<3072x256xbf16, #tpu.memory_space<vmem>>, vector<3072x256xbf16>
      %cst_12 = arith.constant dense<0.000000e+00> : vector<1x256xf32>
      %15 = tpu.matmul %13, %14, %cst_12 {dimension_numbers = #tpu.dot_dimension_numbers<[1], [0], [0], [1], [0, 0, 1, 1], [], []>} : vector<1x3072xbf16>, vector<3072x256xbf16>, vector<1x256xf32> -> vector<1x256xf32>
      %16 = arith.truncf %15 : vector<1x256xf32> to vector<1x256xbf16>
      %c0_13 = arith.constant 0 : index
      %c0_14 = arith.constant 0 : index
      %17 = vector.load %arg4[%c0_13, %c0_14] : memref<256x128xbf16, #tpu.memory_space<vmem>>, vector<256x128xbf16>
      %cst_15 = arith.constant dense<0.000000e+00> : vector<1x128xf32>
      %18 = tpu.matmul %16, %17, %cst_15 {dimension_numbers = #tpu.dot_dimension_numbers<[1], [0], [0], [1], [0, 0, 1, 1], [], []>} : vector<1x256xbf16>, vector<256x128xbf16>, vector<1x128xf32> -> vector<1x128xf32>
      %c0_16 = arith.constant 0 : index
      %c0_17 = arith.constant 0 : index
      %c0_18 = arith.constant 0 : index
      %19 = vector.load %arg5[%c0_16, %c0_17, %c0_18] : memref<1x1x128xf32, #tpu.memory_space<vmem>>, vector<1x1x128xf32>
      %20 = vector.shape_cast %19 : vector<1x1x128xf32> to vector<1x128xf32>
      %21 = vector.shape_cast %18 : vector<1x128xf32> to vector<1x1x128xf32>
      tpu.vector_store %arg5[%c0_16, %c0_17, %c0_18], %21 {strides = array<i32>} : memref<1x1x128xf32, #tpu.memory_space<vmem>>, vector<1x1x128xf32>,
    } else {
    }
    return
  }
  func.func @transform_0(%arg0: i32, %arg1: i32) -> (i32, i32, i32) {
    %c0_i32 = arith.constant 0 : i32
    %c0_i32_0 = arith.constant 0 : i32
    return %arg0, %arg1, %c0_i32 : i32, i32, i32
  }
  func.func @transform_1(%arg0: i32, %arg1: i32) -> (i32, i32) {
    %c0_i32 = arith.constant 0 : i32
    %c0_i32_0 = arith.constant 0 : i32
    %c0_i32_1 = arith.constant 0 : i32
    return %c0_i32, %c0_i32_0 : i32, i32
  }
  func.func @transform_2(%arg0: i32, %arg1: i32) -> (i32, i32) {
    %c0_i32 = arith.constant 0 : i32
    %c0_i32_0 = arith.constant 0 : i32
    %c0_i32_1 = arith.constant 0 : i32
    return %c0_i32, %c0_i32_0 : i32, i32
  }
  func.func @transform_3(%arg0: i32, %arg1: i32) -> (i32, i32, i32) {
    %c0_i32 = arith.constant 0 : i32
    %c0_i32_0 = arith.constant 0 : i32
    %c0_i32_1 = arith.constant 0 : i32
    return %arg0, %c0_i32, %c0_i32_0 : i32, i32, i32
  }
}

</mosaic_0001>

<llo_original>
// kernel: rlca_net_forward.1
$region0: #{rlca_net_forward.1}
  #allocation0 [shape = 'u32[]', space=smem, size = 0x4, offset = 0x4, fixed_abs, tag = 'smem constant byte address 0x4 - core index']
  #allocation1 [shape = 'u32[144,128]{1,0:T(1,128)}', space=vmem, size = 0x12000, scoped, tag = 'internal scratch']
  #allocation2 [shape = 'f32[1,3072]{1,0:T(1,128)}', space=vmem, size = 0x3000, scoped, tag = 'scratch operand']
  %s0 = inlined_call_operand.vmem [shape: bf16[2,64,3072], index: 0, kind: input, shape index: {}]
  %s1 = inlined_call_operand.vmem [shape: bf16[3072,256], index: 1, kind: input, shape index: {}]
  %s2 = inlined_call_operand.vmem [shape: bf16[256,128], index: 2, kind: input, shape index: {}]
  %s3 = inlined_call_operand.vmem [shape: f32[2,1,128], index: 3, kind: output, shape index: {}]
  %s4 = sld [smem:[#allocation0]]
  $region53: #{rlca_net_forward.1} parent=0
    _
  %s6 = ssub.s32 1, %s4
  %s7 = scalar_select 0, %s6, %s4
  loop: start=0, step=1, limit=10
  $region2: #{rlca_net_forward.1} parent=0 // loop_pre_header
    _
  $region3: #{rlca_net_forward.1} parent=0 // loop_header
    %s9 = sphi 0, %s13
    %p10 = scmp.ge.s32.totalorder %s9, 10
    %s16 = sphi 0, %s28
    %s17 = sphi 0, %s24
    %s18 = sphi 0, %s16
    %s19 = sphi 0, %s17
    %s20 = sphi 0, %s18
    %s21 = sphi 0, %s19
    %s33 = sphi 0, %s35
    %s36 = sphi 0, %s33
    %s37 = sphi 0, %s36
    %s53 = sphi 0, %s37
    %s57 = sphi 0, %s57
    %s59 = sphi 0, %s57
    %s60 = sphi 0, %s59
    %s74 = sphi 0, %s60
    %s78 = sphi 0, %s78
    %s80 = sphi 0, %s78
    %s81 = sphi 0, %s80
    %s95 = sphi 0, %s81
    %s101 = sphi 0, %s103
    %s104 = sphi 0, %s101
    %s105 = sphi 0, %s104
    %s121 = sphi 0, %s105
  $region4: #{rlca_net_forward.1} parent=0 // loop_header_branch
    %12 = sbr.rel (%p10) target = $region8
  $region5: #{rlca_net_forward.1} parent=0 // loop_body
    %s14 = ssub.s32 %s9, 1
    %s15 = ssub.s32 %s9, 2
    %s22 = sadd.s32 1, %s17
    %p23 = scmp.ge.s32.totalorder %s22, 4
    %s24 = scalar_select %p23, 0, %s22
    %s25 = sadd.s32 1, %s16
    %s26 = scalar_select %p23, %s25, %s16
    %p27 = scmp.ge.s32.totalorder %s26, 2
    %s28 = scalar_select %p27, 0, %s26
    %s29 = ssub.s32 %s16, %s28
    %s30 = ssub.s32 %s17, %s24
    %s31 = sor.u32 %s29, %s30
    %p32 = scmp.eq.s32.totalorder %s31, 0
    %s34 = sadd.s32 %s33, 1
    %s35 = scalar_select %p32, %s33, %s34
    %p38 = pneg %p32
    %p39 = scmp.eq.s32.totalorder %s9, 7
    %p40 = por %p38, %p39
    %p41 = scmp.ne.s32.totalorder %s33, %s36
    %p42 = scmp.eq.s32.totalorder %s9, 0
    %p43 = por %p41, %p42
    %p44 = scmp.ne.s32.totalorder %s33, %s36
    %p45 = scmp.eq.s32.totalorder %s14, 7
    %p46 = por %p44, %p45
    %p47 = scmp.ne.s32.totalorder %s36, %s37
    %p48 = scmp.eq.s32.totalorder %s14, 0
    %p49 = por %p47, %p48
    %p50 = scmp.ne.s32.totalorder %s36, %s37
    %p51 = scmp.eq.s32.totalorder %s15, 7
    %p52 = por %p50, %p51
    %p54 = scmp.ne.s32.totalorder %s37, %s53
    %p55 = scmp.eq.s32.totalorder %s15, 0
    %p56 = por %p54, %p55
    %s58 = sadd.s32 %s57, 1
    %p61 = scmp.eq.s32.totalorder %s9, 7
    %p62 = scmp.ne.s32.totalorder %s57, %s59
    %p63 = scmp.eq.s32.totalorder %s9, 0
    %p64 = por %p62, %p63
    %p65 = scmp.ne.s32.totalorder %s57, %s59
    %p66 = scmp.eq.s32.totalorder %s14, 7
    %p67 = por %p65, %p66
    %p68 = scmp.ne.s32.totalorder %s59, %s60
    %p69 = scmp.eq.s32.totalorder %s14, 0
    %p70 = por %p68, %p69
    %p71 = scmp.ne.s32.totalorder %s59, %s60
    %p72 = scmp.eq.s32.totalorder %s15, 7
    %p73 = por %p71, %p72
    %p75 = scmp.ne.s32.totalorder %s60, %s74
    %p76 = scmp.eq.s32.totalorder %s15, 0
    %p77 = por %p75, %p76
    %s79 = sadd.s32 %s78, 1
    %p82 = scmp.eq.s32.totalorder %s9, 7
    %p83 = scmp.ne.s32.totalorder %s78, %s80
    %p84 = scmp.eq.s32.totalorder %s9, 0
    %p85 = por %p83, %p84
    %p86 = scmp.ne.s32.totalorder %s78, %s80
    %p87 = scmp.eq.s32.totalorder %s14, 7
    %p88 = por %p86, %p87
    %p89 = scmp.ne.s32.totalorder %s80, %s81
    %p90 = scmp.eq.s32.totalorder %s14, 0
    %p91 = por %p89, %p90
    %p92 = scmp.ne.s32.totalorder %s80, %s81
    %p93 = scmp.eq.s32.totalorder %s15, 7
    %p94 = por %p92, %p93
    %p96 = scmp.ne.s32.totalorder %s81, %s95
    %p97 = scmp.eq.s32.totalorder %s15, 0
    %p98 = por %p96, %p97
    %s99 = ssub.s32 %s16, %s28
    %p100 = scmp.eq.s32.totalorder %s99, 0
    %s102 = sadd.s32 %s101, 1
    %s103 = scalar_select %p100, %s101, %s102
    %p106 = pneg %p100
    %p107 = scmp.eq.s32.totalorder %s9, 7
    %p108 = por %p106, %p107
    %p109 = scmp.ne.s32.totalorder %s101, %s104
    %p110 = scmp.eq.s32.totalorder %s9, 0
    %p111 = por %p109, %p110
    %p112 = scmp.ne.s32.totalorder %s101, %s104
    %p113 = scmp.eq.s32.totalorder %s14, 7
    %p114 = por %p112, %p113
    %p115 = scmp.ne.s32.totalorder %s104, %s105
    %p116 = scmp.eq.s32.totalorder %s14, 0
    %p117 = por %p115, %p116
    %p118 = scmp.ne.s32.totalorder %s104, %s105
    %p119 = scmp.eq.s32.totalorder %s15, 7
    %p120 = por %p118, %p119
    %p122 = scmp.ne.s32.totalorder %s105, %s121
    %p123 = scmp.eq.s32.totalorder %s15, 0
    %p124 = por %p122, %p123
    %p125 = scmp.le.s32.totalorder 1, %s9
    %p126 = scmp.lt.s32.totalorder %s9, 9
    %p127 = pnand %p125, %p126
    %p128 = pneg %p127
    // Predicated region
    $region9: #{rlca_net_forward.1} parent=5 // pred_check
      _
    $region10: #{rlca_net_forward.1} parent=5 // pred_check_branch
      %130 = sbr.rel (%p127) target = $region12
    $region11: #{rlca_net_forward.1} parent=5 // pred_region
      %s131 = ssub.s32 %s9, 1
      // Predicated region
      $region13: #{rlca_net_forward.1} parent=11 // pred_check
        %p132 = pneg %p70
      $region14: #{rlca_net_forward.1} parent=11 // pred_check_branch
        %134 = sbr.rel (%p132) target = $region16
      $region15: #{rlca_net_forward.1} parent=11 // pred_region
        _
      $region16: #{rlca_net_forward.1} parent=11 // pred_fallthru
        _
      // Predicated region
      $region17: #{rlca_net_forward.1} parent=11 // pred_check
        %p135 = pneg %p91
      $region18: #{rlca_net_forward.1} parent=11 // pred_check_branch
        %137 = sbr.rel (%p135) target = $region20
      $region19: #{rlca_net_forward.1} parent=11 // pred_region
        _
      $region20: #{rlca_net_forward.1} parent=11 // pred_fallthru
        _
    $region12: #{rlca_net_forward.1} parent=5 // pred_fallthru
      _
    %p138 = scmp.lt.s32.totalorder %s9, 8
    // Predicated region
    $region21: #{rlca_net_forward.1} parent=5 // pred_check
      %p139 = pneg %p138
    $region22: #{rlca_net_forward.1} parent=5 // pred_check_branch
      %141 = sbr.rel (%p139) target = $region24
    $region23: #{rlca_net_forward.1} parent=5 // pred_region
      // Predicated region
      $region25: #{rlca_net_forward.1} parent=23 // pred_check
        %p142 = pneg %p43
      $region26: #{rlca_net_forward.1} parent=23 // pred_check_branch
        %144 = sbr.rel (%p142) target = $region28
      $region27: #{rlca_net_forward.1} parent=23 // pred_region
        %s145 = smul.u32 2, %s17
        %p146 = scmp.lt.s32.totalorder %s16, 1
        %s147 = scalar_select %p146, %s16, 1
        %p148 = scmp.lt.s32.totalorder %s145, 7
        %s149 = scalar_select %p148, %s145, 7
        %s150 = smul.addr %s149, 24
        %s151 = smul.addr %s147, 192
        %s152 = sadd.s32 %s150, %s151
        %s153 = smul.addr %s152, 4
        %s154 = scalar_lea.vmem %s0, %s153
        %s155 = smul.u32 2, %s17
      $region28: #{rlca_net_forward.1} parent=23 // pred_fallthru
        _
    $region24: #{rlca_net_forward.1} parent=5 // pred_fallthru
      _
    %p156 = scmp.le.s32.totalorder 1, %s9
    %p157 = scmp.lt.s32.totalorder %s9, 9
    %p158 = pnand %p156, %p157
    %p159 = pneg %p158
    // Predicated region
    $region29: #{rlca_net_forward.1} parent=5 // pred_check
      _
    $region30: #{rlca_net_forward.1} parent=5 // pred_check_branch
      %161 = sbr.rel (%p158) target = $region32
    $region31: #{rlca_net_forward.1} parent=5 // pred_region
      %s162 = ssub.s32 %s9, 1
      %s163 = smul.u32 2, %s19
      %p164 = scmp.lt.s32.totalorder %s18, 1
      %s165 = scalar_select %p164, %s18, 1
      %p166 = scmp.lt.s32.totalorder %s163, 7
      %s167 = scalar_select %p166, %s163, 7
      %s168 = smul.addr %s167, 24
      %s169 = smul.addr %s165, 192
      %s170 = sadd.s32 %s168, %s169
      %s171 = smul.addr %s170, 4
      %s172 = scalar_lea.vmem %s0, %s171
      %p173 = pneg %p49
      %p174 = pneg %p46
      %p175 = pneg %p70
      %p176 = pneg %p67
      %p177 = pneg %p91
      %p178 = pneg %p88
      %p179 = pneg %p117
      %p180 = pneg %p114
      %p181 = scmp.lt.s32.totalorder %s18, 1
      %s182 = scalar_select %p181, %s18, 1
      %s183 = scalar_lea.vmem %s3, %s182
      %s184 = smul.u32 2, %s19
      %p185 = scmp.lt.s32.totalorder %s18, 1
      %s186 = scalar_select %p185, %s18, 1
      %p187 = scmp.lt.s32.totalorder %s184, 7
      %s188 = scalar_select %p187, %s184, 7
      %s189 = smul.addr %s188, 24
      %s190 = smul.addr %s186, 192
      %s191 = sadd.s32 %s189, %s190
      %s192 = smul.addr %s191, 4
      %s193 = scalar_lea.vmem %s0, %s192
      %s194 = smul.u32 2, %s19
      %p195 = scmp.lt.s32.totalorder %s18, 1
      %s196 = scalar_select %p195, %s18, 1
      %s197 = scalar_lea.vmem %s3, %s196
      %p199 = scmp.eq.s32.totalorder %s19, 0
      // Predicated region
      $region33: #{rlca_net_forward.1} parent=31 // pred_check
        %p200 = pneg %p199
      $region34: #{rlca_net_forward.1} parent=31 // pred_check_branch
        %202 = sbr.rel (%p200) target = $region36
      $region35: #{rlca_net_forward.1} parent=31 // pred_region
        %203 = vst [vmem:[#allocation2] sm:$0xff] 0.0
        %204 = vst [vmem:[#allocation2 + $0x8] sm:$0xff] 0.0
        %205 = vst [vmem:[#allocation2 + $0x10] sm:$0xff] 0.0
      $region36: #{rlca_net_forward.1} parent=31 // pred_fallthru
        _
      %v206 = vld [vmem:[#allocation2] sm:$0xff]
      %v207 = vld [vmem:[#allocation2 + $0x8] sm:$0xff]
      %v208 = vld [vmem:[#allocation2 + $0x10] sm:$0xff]
      %v209 = vld [vmem:[%s193] sm:$0xff]
      %v210 = vld [vmem:[%s193 + $0x8] sm:$0xff]
      %v211 = vld [vmem:[%s193 + $0x10] sm:$0xff]
      %v212 = vld [vmem:[%s193 + $0x18] sm:$0xff]
      %v213 = vld [vmem:[%s193 + $0x20] sm:$0xff]
      %v214 = vld [vmem:[%s193 + $0x28] sm:$0xff]
      %v215 = vld [vmem:[%s193 + $0x30] sm:$0xff]
      %v216 = vld [vmem:[%s193 + $0x38] sm:$0xff]
      %v217 = vld [vmem:[%s193 + $0x40] sm:$0xff]
      %v218 = vld [vmem:[%s193 + $0x48] sm:$0xff]
      %v219 = vld [vmem:[%s193 + $0x50] sm:$0xff]
      %v220 = vld [vmem:[%s193 + $0x58] sm:$0xff]
      %v221 = vld [vmem:[%s193 + $0x60] sm:$0xff]
      %v222 = vld [vmem:[%s193 + $0x68] sm:$0xff]
      %v223 = vld [vmem:[%s193 + $0x70] sm:$0xff]
      %v224 = vld [vmem:[%s193 + $0x78] sm:$0xff]
      %v225 = vld [vmem:[%s193 + $0x80] sm:$0xff]
      %v226 = vld [vmem:[%s193 + $0x88] sm:$0xff]
      %v227 = vld [vmem:[%s193 + $0x90] sm:$0xff]
      %v228 = vld [vmem:[%s193 + $0x98] sm:$0xff]
      %v229 = vld [vmem:[%s193 + $0xa0] sm:$0xff]
      %v230 = vld [vmem:[%s193 + $0xa8] sm:$0xff]
      %v231 = vld [vmem:[%s193 + $0xb0] sm:$0xff]
      %v232 = vld [vmem:[%s193 + $0xb8] sm:$0xff]
      %v233 = vunpack.c.l.bf16 %v209
      %v234 = vunpack.c.h.bf16 %v209
      %v235 = vunpack.c.l.bf16 %v210
      %v236 = vunpack.c.h.bf16 %v210
      %v237 = vunpack.c.l.bf16 %v211
      %v238 = vunpack.c.h.bf16 %v211
      %v239 = vunpack.c.l.bf16 %v212
      %v240 = vunpack.c.h.bf16 %v212
      %v241 = vunpack.c.l.bf16 %v213
      %v242 = vunpack.c.h.bf16 %v213
      %v243 = vunpack.c.l.bf16 %v214
      %v244 = vunpack.c.h.bf16 %v214
      %v245 = vunpack.c.l.bf16 %v215
      %v246 = vunpack.c.h.bf16 %v215
      %v247 = vunpack.c.l.bf16 %v216
      %v248 = vunpack.c.h.bf16 %v216
      %v249 = vunpack.c.l.bf16 %v217
      %v250 = vunpack.c.h.bf16 %v217
      %v251 = vunpack.c.l.bf16 %v218
      %v252 = vunpack.c.h.bf16 %v218
      %v253 = vunpack.c.l.bf16 %v219
      %v254 = vunpack.c.h.bf16 %v219
      %v255 = vunpack.c.l.bf16 %v220
      %v256 = vunpack.c.h.bf16 %v220
      %v257 = vunpack.c.l.bf16 %v221
      %v258 = vunpack.c.h.bf16 %v221
      %v259 = vunpack.c.l.bf16 %v222
      %v260 = vunpack.c.h.bf16 %v222
      %v261 = vunpack.c.l.bf16 %v223
      %v262 = vunpack.c.h.bf16 %v223
      %v263 = vunpack.c.l.bf16 %v224
      %v264 = vunpack.c.h.bf16 %v224
      %v265 = vunpack.c.l.bf16 %v225
      %v266 = vunpack.c.h.bf16 %v225
      %v267 = vunpack.c.l.bf16 %v226
      %v268 = vunpack.c.h.bf16 %v226
      %v269 = vunpack.c.l.bf16 %v227
      %v270 = vunpack.c.h.bf16 %v227
      %v271 = vunpack.c.l.bf16 %v228
      %v272 = vunpack.c.h.bf16 %v228
      %v273 = vunpack.c.l.bf16 %v229
      %v274 = vunpack.c.h.bf16 %v229
      %v275 = vunpack.c.l.bf16 %v230
      %v276 = vunpack.c.h.bf16 %v230
      %v277 = vunpack.c.l.bf16 %v231
      %v278 = vunpack.c.h.bf16 %v231
      %v279 = vunpack.c.l.bf16 %v232
      %v280 = vunpack.c.h.bf16 %v232
      %v281 = vadd.f32 %v233, %v257
      %v282 = vrot.slane %v281, 4
      %v283 = vadd.f32 %v281, %v282
      %v284 = vrot.slane %v283, 2
      %v285 = vadd.f32 %v283, %v284
      %v286 = vrot.slane %v285, 1
      %v287 = vadd.f32 %v285, %v286
      %v288 = vadd.f32 %v234, %v258
      %v289 = vrot.slane %v288, 4
      %v290 = vadd.f32 %v288, %v289
      %v291 = vrot.slane %v290, 2
      %v292 = vadd.f32 %v290, %v291
      %v293 = vrot.slane %v292, 1
      %v294 = vadd.f32 %v292, %v293
      %v295 = vadd.f32 %v235, %v259
      %v296 = vrot.slane %v295, 4
      %v297 = vadd.f32 %v295, %v296
      %v298 = vrot.slane %v297, 2
      %v299 = vadd.f32 %v297, %v298
      %v300 = vrot.slane %v299, 1
      %v301 = vadd.f32 %v299, %v300
      %v302 = vadd.f32 %v236, %v260
      %v303 = vrot.slane %v302, 4
      %v304 = vadd.f32 %v302, %v303
      %v305 = vrot.slane %v304, 2
      %v306 = vadd.f32 %v304, %v305
      %v307 = vrot.slane %v306, 1
      %v308 = vadd.f32 %v306, %v307
      %v309 = vadd.f32 %v237, %v261
      %v310 = vrot.slane %v309, 4
      %v311 = vadd.f32 %v309, %v310
      %v312 = vrot.slane %v311, 2
      %v313 = vadd.f32 %v311, %v312
      %v314 = vrot.slane %v313, 1
      %v315 = vadd.f32 %v313, %v314
      %v316 = vadd.f32 %v238, %v262
      %v317 = vrot.slane %v316, 4
      %v318 = vadd.f32 %v316, %v317
      %v319 = vrot.slane %v318, 2
      %v320 = vadd.f32 %v318, %v319
      %v321 = vrot.slane %v320, 1
      %v322 = vadd.f32 %v320, %v321
      %v323 = vadd.f32 %v239, %v263
      %v324 = vrot.slane %v323, 4
      %v325 = vadd.f32 %v323, %v324
      %v326 = vrot.slane %v325, 2
      %v327 = vadd.f32 %v325, %v326
      %v328 = vrot.slane %v327, 1
      %v329 = vadd.f32 %v327, %v328
      %v330 = vadd.f32 %v240, %v264
      %v331 = vrot.slane %v330, 4
      %v332 = vadd.f32 %v330, %v331
      %v333 = vrot.slane %v332, 2
      %v334 = vadd.f32 %v332, %v333
      %v335 = vrot.slane %v334, 1
      %v336 = vadd.f32 %v334, %v335
      %v337 = vadd.f32 %v241, %v265
      %v338 = vrot.slane %v337, 4
      %v339 = vadd.f32 %v337, %v338
      %v340 = vrot.slane %v339, 2
      %v341 = vadd.f32 %v339, %v340
      %v342 = vrot.slane %v341, 1
      %v343 = vadd.f32 %v341, %v342
      %v344 = vadd.f32 %v242, %v266
      %v345 = vrot.slane %v344, 4
      %v346 = vadd.f32 %v344, %v345
      %v347 = vrot.slane %v346, 2
      %v348 = vadd.f32 %v346, %v347
      %v349 = vrot.slane %v348, 1
      %v350 = vadd.f32 %v348, %v349
      %v351 = vadd.f32 %v243, %v267
      %v352 = vrot.slane %v351, 4
      %v353 = vadd.f32 %v351, %v352
      %v354 = vrot.slane %v353, 2
      %v355 = vadd.f32 %v353, %v354
      %v356 = vrot.slane %v355, 1
      %v357 = vadd.f32 %v355, %v356
      %v358 = vadd.f32 %v244, %v268
      %v359 = vrot.slane %v358, 4
      %v360 = vadd.f32 %v358, %v359
      %v361 = vrot.slane %v360, 2
      %v362 = vadd.f32 %v360, %v361
      %v363 = vrot.slane %v362, 1
      %v364 = vadd.f32 %v362, %v363
      %v365 = vadd.f32 %v245, %v269
      %v366 = vrot.slane %v365, 4
      %v367 = vadd.f32 %v365, %v366
      %v368 = vrot.slane %v367, 2
      %v369 = vadd.f32 %v367, %v368
      %v370 = vrot.slane %v369, 1
      %v371 = vadd.f32 %v369, %v370
      %v372 = vadd.f32 %v246, %v270
      %v373 = vrot.slane %v372, 4
      %v374 = vadd.f32 %v372, %v373
      %v375 = vrot.slane %v374, 2
      %v376 = vadd.f32 %v374, %v375
      %v377 = vrot.slane %v376, 1
      %v378 = vadd.f32 %v376, %v377
      %v379 = vadd.f32 %v247, %v271
      %v380 = vrot.slane %v379, 4
      %v381 = vadd.f32 %v379, %v380
      %v382 = vrot.slane %v381, 2
      %v383 = vadd.f32 %v381, %v382
      %v384 = vrot.slane %v383, 1
      %v385 = vadd.f32 %v383, %v384
      %v386 = vadd.f32 %v248, %v272
      %v387 = vrot.slane %v386, 4
      %v388 = vadd.f32 %v386, %v387
      %v389 = vrot.slane %v388, 2
      %v390 = vadd.f32 %v388, %v389
      %v391 = vrot.slane %v390, 1
      %v392 = vadd.f32 %v390, %v391
      %v393 = vadd.f32 %v249, %v273
      %v394 = vrot.slane %v393, 4
      %v395 = vadd.f32 %v393, %v394
      %v396 = vrot.slane %v395, 2
      %v397 = vadd.f32 %v395, %v396
      %v398 = vrot.slane %v397, 1
      %v399 = vadd.f32 %v397, %v398
      %v400 = vadd.f32 %v250, %v274
      %v401 = vrot.slane %v400, 4
      %v402 = vadd.f32 %v400, %v401
      %v403 = vrot.slane %v402, 2
      %v404 = vadd.f32 %v402, %v403
      %v405 = vrot.slane %v404, 1
      %v406 = vadd.f32 %v404, %v405
      %v407 = vadd.f32 %v251, %v275
      %v408 = vrot.slane %v407, 4
      %v409 = vadd.f32 %v407, %v408
      %v410 = vrot.slane %v409, 2
      %v411 = vadd.f32 %v409, %v410
      %v412 = vrot.slane %v411, 1
      %v413 = vadd.f32 %v411, %v412
      %v414 = vadd.f32 %v252, %v276
      %v415 = vrot.slane %v414, 4
      %v416 = vadd.f32 %v414, %v415
      %v417 = vrot.slane %v416, 2
      %v418 = vadd.f32 %v416, %v417
      %v419 = vrot.slane %v418, 1
      %v420 = vadd.f32 %v418, %v419
      %v421 = vadd.f32 %v253, %v277
      %v422 = vrot.slane %v421, 4
      %v423 = vadd.f32 %v421, %v422
      %v424 = vrot.slane %v423, 2
      %v425 = vadd.f32 %v423, %v424
      %v426 = vrot.slane %v425, 1
      %v427 = vadd.f32 %v425, %v426
      %v428 = vadd.f32 %v254, %v278
      %v429 = vrot.slane %v428, 4
      %v430 = vadd.f32 %v428, %v429
      %v431 = vrot.slane %v430, 2
      %v432 = vadd.f32 %v430, %v431
      %v433 = vrot.slane %v432, 1
      %v434 = vadd.f32 %v432, %v433
      %v435 = vadd.f32 %v255, %v279
      %v436 = vrot.slane %v435, 4
      %v437 = vadd.f32 %v435, %v436
      %v438 = vrot.slane %v437, 2
      %v439 = vadd.f32 %v437, %v438
      %v440 = vrot.slane %v439, 1
      %v441 = vadd.f32 %v439, %v440
      %v442 = vadd.f32 %v256, %v280
      %v443 = vrot.slane %v442, 4
      %v444 = vadd.f32 %v442, %v443
      %v445 = vrot.slane %v444, 2
      %v446 = vadd.f32 %v444, %v445
      %v447 = vrot.slane %v446, 1
      %v448 = vadd.f32 %v446, %v447
      %v473 = vcombine.low %v287, %v294
      %v474 = vcombine.low %v301, %v308
      %v475 = vcombine.low %v315, %v322
      %v476 = vcombine.low %v329, %v336
      %v478 = vunpack.c.l.s4 1966171168
      %v479 = vunpack.c.0.s8 %v478
      %v480 = vlaneseq
      %v481 = vshrl.u32 %v480, 7
      %v482 = vsub.s32 %v479, %v481
      %v483 = vrot.slane %v473, %v482
      %v485 = vunpack.c.l.s4 1966171168
      %v486 = vunpack.c.0.s8 %v485
      %v487 = vlaneseq
      %v488 = vshrl.u32 %v487, 7
      %v489 = vsub.s32 %v486, %v488
      %v490 = vrot.slane %v474, %v489
      %v492 = vunpack.c.l.s4 1966171168
      %v493 = vunpack.c.0.s8 %v492
      %v494 = vlaneseq
      %v495 = vshrl.u32 %v494, 7
      %v496 = vsub.s32 %v493, %v495
      %v497 = vrot.slane %v475, %v496
      %v499 = vunpack.c.l.s4 1966171168
      %v500 = vunpack.c.0.s8 %v499
      %v501 = vlaneseq
      %v502 = vshrl.u32 %v501, 7
      %v503 = vsub.s32 %v500, %v502
      %v504 = vrot.slane %v476, %v503
      %v505 = vcombine.low %v483, %v490
      %v506 = vcombine.low %v497, %v504
      %v508 = vunpack.c.l.s4 1966171168
      %v509 = vunpack.c.0.s8 %v508
      %v510 = vlaneseq
      %v511 = vshrl.u32 %v510, 7
      %v512 = vsub.s32 %v509, %v511
      %v513 = vrot.slane %v505, %v512
      %v515 = vunpack.c.l.s4 1966171168
      %v516 = vunpack.c.0.s8 %v515
      %v517 = vlaneseq
      %v518 = vshrl.u32 %v517, 7
      %v519 = vsub.s32 %v516, %v518
      %v520 = vrot.slane %v506, %v519
      %v521 = vcombine.low %v513, %v520
      %v522 = vcombine.low %v343, %v350
      %v523 = vcombine.low %v357, %v364
      %v524 = vcombine.low %v371, %v378
      %v525 = vcombine.low %v385, %v392
      %v527 = vunpack.c.l.s4 1966171168
      %v528 = vunpack.c.0.s8 %v527
      %v529 = vlaneseq
      %v530 = vshrl.u32 %v529, 7
      %v531 = vsub.s32 %v528, %v530
      %v532 = vrot.slane %v522, %v531
      %v534 = vunpack.c.l.s4 1966171168
      %v535 = vunpack.c.0.s8 %v534
      %v536 = vlaneseq
      %v537 = vshrl.u32 %v536, 7
      %v538 = vsub.s32 %v535, %v537
      %v539 = vrot.slane %v523, %v538
      %v541 = vunpack.c.l.s4 1966171168
      %v542 = vunpack.c.0.s8 %v541
      %v543 = vlaneseq
      %v544 = vshrl.u32 %v543, 7
      %v545 = vsub.s32 %v542, %v544
      %v546 = vrot.slane %v524, %v545
      %v548 = vunpack.c.l.s4 1966171168
      %v549 = vunpack.c.0.s8 %v548
      %v550 = vlaneseq
      %v551 = vshrl.u32 %v550, 7
      %v552 = vsub.s32 %v549, %v551
      %v553 = vrot.slane %v525, %v552
      %v554 = vcombine.low %v532, %v539
      %v555 = vcombine.low %v546, %v553
      %v557 = vunpack.c.l.s4 1966171168
      %v558 = vunpack.c.0.s8 %v557
      %v559 = vlaneseq
      %v560 = vshrl.u32 %v559, 7
      %v561 = vsub.s32 %v558, %v560
      %v562 = vrot.slane %v554, %v561
      %v564 = vunpack.c.l.s4 1966171168
      %v565 = vunpack.c.0.s8 %v564
      %v566 = vlaneseq
      %v567 = vshrl.u32 %v566, 7
      %v568 = vsub.s32 %v565, %v567
      %v569 = vrot.slane %v555, %v568
      %v570 = vcombine.low %v562, %v569
      %v571 = vcombine.low %v399, %v406
      %v572 = vcombine.low %v413, %v420
      %v573 = vcombine.low %v427, %v434
      %v574 = vcombine.low %v441, %v448
      %v576 = vunpack.c.l.s4 1966171168
      %v577 = vunpack.c.0.s8 %v576
      %v578 = vlaneseq
      %v579 = vshrl.u32 %v578, 7
      %v580 = vsub.s32 %v577, %v579
      %v581 = vrot.slane %v571, %v580
      %v583 = vunpack.c.l.s4 1966171168
      %v584 = vunpack.c.0.s8 %v583
      %v585 = vlaneseq
      %v586 = vshrl.u32 %v585, 7
      %v587 = vsub.s32 %v584, %v586
      %v588 = vrot.slane %v572, %v587
      %v590 = vunpack.c.l.s4 1966171168
      %v591 = vunpack.c.0.s8 %v590
      %v592 = vlaneseq
      %v593 = vshrl.u32 %v592, 7
      %v594 = vsub.s32 %v591, %v593
      %v595 = vrot.slane %v573, %v594
      %v597 = vunpack.c.l.s4 1966171168
      %v598 = vunpack.c.0.s8 %v597
      %v599 = vlaneseq
      %v600 = vshrl.u32 %v599, 7
      %v601 = vsub.s32 %v598, %v600
      %v602 = vrot.slane %v574, %v601
      %v603 = vcombine.low %v581, %v588
      %v604 = vcombine.low %v595, %v602
      %v606 = vunpack.c.l.s4 1966171168
      %v607 = vunpack.c.0.s8 %v606
      %v608 = vlaneseq
      %v609 = vshrl.u32 %v608, 7
      %v610 = vsub.s32 %v607, %v609
      %v611 = vrot.slane %v603, %v610
      %v613 = vunpack.c.l.s4 1966171168
      %v614 = vunpack.c.0.s8 %v613
      %v615 = vlaneseq
      %v616 = vshrl.u32 %v615, 7
      %v617 = vsub.s32 %v614, %v616
      %v618 = vrot.slane %v604, %v617
      %v619 = vcombine.low %v611, %v618
      %v623 = vadd.f32 %v206, %v521
      %v624 = vadd.f32 %v207, %v570
      %v625 = vadd.f32 %v208, %v619
      %626 = vst [vmem:[#allocation2] sm:$0xff] %v623
      %627 = vst [vmem:[#allocation2 + $0x8] sm:$0xff] %v624
      %628 = vst [vmem:[#allocation2 + $0x10] sm:$0xff] %v625
      %p629 = scmp.eq.s32.totalorder %s19, 3
      // Predicated region
      $region37: #{rlca_net_forward.1} parent=31 // pred_check
        %p630 = pneg %p629
      $region38: #{rlca_net_forward.1} parent=31 // pred_check_branch
        %632 = sbr.rel (%p630) target = $region40
      $region39: #{rlca_net_forward.1} parent=31 // pred_region
        %v633 = vld [vmem:[#allocation2] sm:$0xff]
        %v634 = vld [vmem:[#allocation2 + $0x8] sm:$0xff]
        %v635 = vld [vmem:[#allocation2 + $0x10] sm:$0xff]
        %v639 = vlaneseq
        %v640 = vshrl.u32 %v639, 7
        %v641 = vsub.s32 0, %v640
        %v642 = vrot.slane %v633, %v641
        %v643 = vlaneseq
        %v644 = vshrl.u32 %v643, 7
        %v645 = vsub.s32 1, %v644
        %v646 = vrot.slane %v633, %v645
        %v647 = vlaneseq
        %v648 = vshrl.u32 %v647, 7
        %v649 = vsub.s32 2, %v648
        %v650 = vrot.slane %v633, %v649
        %v651 = vlaneseq
        %v652 = vshrl.u32 %v651, 7
        %v653 = vsub.s32 3, %v652
        %v654 = vrot.slane %v633, %v653
        %v655 = vlaneseq
        %v656 = vshrl.u32 %v655, 7
        %v657 = vsub.s32 4, %v656
        %v658 = vrot.slane %v633, %v657
        %v659 = vlaneseq
        %v660 = vshrl.u32 %v659, 7
        %v661 = vsub.s32 5, %v660
        %v662 = vrot.slane %v633, %v661
        %v663 = vlaneseq
        %v664 = vshrl.u32 %v663, 7
        %v665 = vsub.s32 6, %v664
        %v666 = vrot.slane %v633, %v665
        %v667 = vlaneseq
        %v668 = vshrl.u32 %v667, 7
        %v669 = vsub.s32 7, %v668
        %v670 = vrot.slane %v633, %v669
        %v671 = vlaneseq
        %v672 = vshrl.u32 %v671, 7
        %v673 = vsub.s32 0, %v672
        %v674 = vrot.slane %v634, %v673
        %v675 = vlaneseq
        %v676 = vshrl.u32 %v675, 7
        %v677 = vsub.s32 1, %v676
        %v678 = vrot.slane %v634, %v677
        %v679 = vlaneseq
        %v680 = vshrl.u32 %v679, 7
        %v681 = vsub.s32 2, %v680
        %v682 = vrot.slane %v634, %v681
        %v683 = vlaneseq
        %v684 = vshrl.u32 %v683, 7
        %v685 = vsub.s32 3, %v684
        %v686 = vrot.slane %v634, %v685
        %v687 = vlaneseq
        %v688 = vshrl.u32 %v687, 7
        %v689 = vsub.s32 4, %v688
        %v690 = vrot.slane %v634, %v689
        %v691 = vlaneseq
        %v692 = vshrl.u32 %v691, 7
        %v693 = vsub.s32 5, %v692
        %v694 = vrot.slane %v634, %v693
        %v695 = vlaneseq
        %v696 = vshrl.u32 %v695, 7
        %v697 = vsub.s32 6, %v696
        %v698 = vrot.slane %v634, %v697
        %v699 = vlaneseq
        %v700 = vshrl.u32 %v699, 7
        %v701 = vsub.s32 7, %v700
        %v702 = vrot.slane %v634, %v701
        %v703 = vlaneseq
        %v704 = vshrl.u32 %v703, 7
        %v705 = vsub.s32 0, %v704
        %v706 = vrot.slane %v635, %v705
        %v707 = vlaneseq
        %v708 = vshrl.u32 %v707, 7
        %v709 = vsub.s32 1, %v708
        %v710 = vrot.slane %v635, %v709
        %v711 = vlaneseq
        %v712 = vshrl.u32 %v711, 7
        %v713 = vsub.s32 2, %v712
        %v714 = vrot.slane %v635, %v713
        %v715 = vlaneseq
        %v716 = vshrl.u32 %v715, 7
        %v717 = vsub.s32 3, %v716
        %v718 = vrot.slane %v635, %v717
        %v719 = vlaneseq
        %v720 = vshrl.u32 %v719, 7
        %v721 = vsub.s32 4, %v720
        %v722 = vrot.slane %v635, %v721
        %v723 = vlaneseq
        %v724 = vshrl.u32 %v723, 7
        %v725 = vsub.s32 5, %v724
        %v726 = vrot.slane %v635, %v725
        %v727 = vlaneseq
        %v728 = vshrl.u32 %v727, 7
        %v729 = vsub.s32 6, %v728
        %v730 = vrot.slane %v635, %v729
        %v731 = vlaneseq
        %v732 = vshrl.u32 %v731, 7
        %v733 = vsub.s32 7, %v732
        %v734 = vrot.slane %v635, %v733
        %v759 = vpack.c.bf16 %v642, %v642
        %v760 = vpack.c.bf16 %v646, %v646
        %v761 = vpack.c.bf16 %v650, %v650
        %v762 = vpack.c.bf16 %v654, %v654
        %v763 = vpack.c.bf16 %v658, %v658
        %v764 = vpack.c.bf16 %v662, %v662
        %v765 = vpack.c.bf16 %v666, %v666
        %v766 = vpack.c.bf16 %v670, %v670
        %v767 = vpack.c.bf16 %v674, %v674
        %v768 = vpack.c.bf16 %v678, %v678
        %v769 = vpack.c.bf16 %v682, %v682
        %v770 = vpack.c.bf16 %v686, %v686
        %v771 = vpack.c.bf16 %v690, %v690
        %v772 = vpack.c.bf16 %v694, %v694
        %v773 = vpack.c.bf16 %v698, %v698
        %v774 = vpack.c.bf16 %v702, %v702
        %v775 = vpack.c.bf16 %v706, %v706
        %v776 = vpack.c.bf16 %v710, %v710
        %v777 = vpack.c.bf16 %v714, %v714
        %v778 = vpack.c.bf16 %v718, %v718
        %v779 = vpack.c.bf16 %v722, %v722
        %v780 = vpack.c.bf16 %v726, %v726
        %v781 = vpack.c.bf16 %v730, %v730
        %v782 = vpack.c.bf16 %v734, %v734
        %v783 = vld [vmem:[%s1] sm:$0xff]
        %v784 = vld [vmem:[%s1 + $0x8] sm:$0xff]
        %v785 = vld [vmem:[%s1 + $0x10] sm:$0xff]
        %v786 = vld [vmem:[%s1 + $0x18] sm:$0xff]
        %v787 = vld [vmem:[%s1 + $0x20] sm:$0xff]
        %v788 = vld [vmem:[%s1 + $0x28] sm:$0xff]
        %v789 = vld [vmem:[%s1 + $0x30] sm:$0xff]
        %v790 = vld [vmem:[%s1 + $0x38] sm:$0xff]
        %v791 = vld [vmem:[%s1 + $0x40] sm:$0xff]
        %v792 = vld [vmem:[%s1 + $0x48] sm:$0xff]
        %v793 = vld [vmem:[%s1 + $0x50] sm:$0xff]
        %v794 = vld [vmem:[%s1 + $0x58] sm:$0xff]
        %v795 = vld [vmem:[%s1 + $0x60] sm:$0xff]
        %v796 = vld [vmem:[%s1 + $0x68] sm:$0xff]
        %v797 = vld [vmem:[%s1 + $0x70] sm:$0xff]
        %v798 = vld [vmem:[%s1 + $0x78] sm:$0xff]
        %v799 = vld [vmem:[%s1 + $0x80] sm:$0xff]
        %v800 = vld [vmem:[%s1 + $0x88] sm:$0xff]
        %v801 = vld [vmem:[%s1 + $0x90] sm:$0xff]
        %v802 = vld [vmem:[%s1 + $0x98] sm:$0xff]
        %v803 = vld [vmem:[%s1 + $0xa0] sm:$0xff]
        %v804 = vld [vmem:[%s1 + $0xa8] sm:$0xff]
        %v805 = vld [vmem:[%s1 + $0xb0] sm:$0xff]
        %v806 = vld [vmem:[%s1 + $0xb8] sm:$0xff]
        %v807 = vld [vmem:[%s1 + $0xc0] sm:$0xff]
        %v808 = vld [vmem:[%s1 + $0xc8] sm:$0xff]
        %v809 = vld [vmem:[%s1 + $0xd0] sm:$0xff]
        %v810 = vld [vmem:[%s1 + $0xd8] sm:$0xff]
        %v811 = vld [vmem:[%s1 + $0xe0] sm:$0xff]
        %v812 = vld [vmem:[%s1 + $0xe8] sm:$0xff]
        %v813 = vld [vmem:[%s1 + $0xf0] sm:$0xff]
        %v814 = vld [vmem:[%s1 + $0xf8] sm:$0xff]
        %v815 = vld [vmem:[%s1 + $0x100] sm:$0xff]
        %v816 = vld [vmem:[%s1 + $0x108] sm:$0xff]
        %v817 = vld [vmem:[%s1 + $0x110] sm:$0xff]
        %v818 = vld [vmem:[%s1 + $0x118] sm:$0xff]
        %v819 = vld [vmem:[%s1 + $0x120] sm:$0xff]
        %v820 = vld [vmem:[%s1 + $0x128] sm:$0xff]
        %v821 = vld [vmem:[%s1 + $0x130] sm:$0xff]
        %v822 = vld [vmem:[%s1 + $0x138] sm:$0xff]
        %v823 = vld [vmem:[%s1 + $0x140] sm:$0xff]
        %v824 = vld [vmem:[%s1 + $0x148] sm:$0xff]
        %v825 = vld [vmem:[%s1 + $0x150] sm:$0xff]
        %v826 = vld [vmem:[%s1 + $0x158] sm:$0xff]
        %v827 = vld [vmem:[%s1 + $0x160] sm:$0xff]
        %v828 = vld [vmem:[%s1 + $0x168] sm:$0xff]
        %v829 = vld [vmem:[%s1 + $0x170] sm:$0xff]
        %v830 = vld [vmem:[%s1 + $0x178] sm:$0xff]
        %v831 = vld [vmem:[%s1 + $0x180] sm:$0xff]
        %v832 = vld [vmem:[%s1 + $0x188] sm:$0xff]
        %v833 = vld [vmem:[%s1 + $0x190] sm:$0xff]
        %v834 = vld [vmem:[%s1 + $0x198] sm:$0xff]
        %v835 = vld [vmem:[%s1 + $0x1a0] sm:$0xff]
        %v836 = vld [vmem:[%s1 + $0x1a8] sm:$0xff]
        %v837 = vld [vmem:[%s1 + $0x1b0] sm:$0xff]
        %v838 = vld [vmem:[%s1 + $0x1b8] sm:$0xff]
        %v839 = vld [vmem:[%s1 + $0x1c0] sm:$0xff]
        %v840 = vld [vmem:[%s1 + $0x1c8] sm:$0xff]
        %v841 = vld [vmem:[%s1 + $0x1d0] sm:$0xff]
        %v842 = vld [vmem:[%s1 + $0x1d8] sm:$0xff]
        %v843 = vld [vmem:[%s1 + $0x1e0] sm:$0xff]
        %v844 = vld [vmem:[%s1 + $0x1e8] sm:$0xff]
        %v845 = vld [vmem:[%s1 + $0x1f0] sm:$0xff]
        %v846 = vld [vmem:[%s1 + $0x1f8] sm:$0xff]
        %v847 = vld [vmem:[%s1 + $0x200] sm:$0xff]
        %v848 = vld [vmem:[%s1 + $0x208] sm:$0xff]
        %v849 = vld [vmem:[%s1 + $0x210] sm:$0xff]
        %v850 = vld [vmem:[%s1 + $0x218] sm:$0xff]
        %v851 = vld [vmem:[%s1 + $0x220] sm:$0xff]
        %v852 = vld [vmem:[%s1 + $0x228] sm:$0xff]
        %v853 = vld [vmem:[%s1 + $0x230] sm:$0xff]
        %v854 = vld [vmem:[%s1 + $0x238] sm:$0xff]
        %v855 = vld [vmem:[%s1 + $0x240] sm:$0xff]
        %v856 = vld [vmem:[%s1 + $0x248] sm:$0xff]
        %v857 = vld [vmem:[%s1 + $0x250] sm:$0xff]
        %v858 = vld [vmem:[%s1 + $0x258] sm:$0xff]
        %v859 = vld [vmem:[%s1 + $0x260] sm:$0xff]
        %v860 = vld [vmem:[%s1 + $0x268] sm:$0xff]
        %v861 = vld [vmem:[%s1 + $0x270] sm:$0xff]
        %v862 = vld [vmem:[%s1 + $0x278] sm:$0xff]
        %v863 = vld [vmem:[%s1 + $0x280] sm:$0xff]
        %v864 = vld [vmem:[%s1 + $0x288] sm:$0xff]
        %v865 = vld [vmem:[%s1 + $0x290] sm:$0xff]
        %v866 = vld [vmem:[%s1 + $0x298] sm:$0xff]
        %v867 = vld [vmem:[%s1 + $0x2a0] sm:$0xff]
        %v868 = vld [vmem:[%s1 + $0x2a8] sm:$0xff]
        %v869 = vld [vmem:[%s1 + $0x2b0] sm:$0xff]
        %v870 = vld [vmem:[%s1 + $0x2b8] sm:$0xff]
        %v871 = vld [vmem:[%s1 + $0x2c0] sm:$0xff]
        %v872 = vld [vmem:[%s1 + $0x2c8] sm:$0xff]
        %v873 = vld [vmem:[%s1 + $0x2d0] sm:$0xff]
        %v874 = vld [vmem:[%s1 + $0x2d8] sm:$0xff]
        %v875 = vld [vmem:[%s1 + $0x2e0] sm:$0xff]
        %v876 = vld [vmem:[%s1 + $0x2e8] sm:$0xff]
        %v877 = vld [vmem:[%s1 + $0x2f0] sm:$0xff]
        %v878 = vld [vmem:[%s1 + $0x2f8] sm:$0xff]
        %v879 = vld [vmem:[%s1 + $0x300] sm:$0xff]
        %v880 = vld [vmem:[%s1 + $0x308] sm:$0xff]
        %v881 = vld [vmem:[%s1 + $0x310] sm:$0xff]
        %v882 = vld [vmem:[%s1 + $0x318] sm:$0xff]
        %v883 = vld [vmem:[%s1 + $0x320] sm:$0xff]
        %v884 = vld [vmem:[%s1 + $0x328] sm:$0xff]
        %v885 = vld [vmem:[%s1 + $0x330] sm:$0xff]
        %v886 = vld [vmem:[%s1 + $0x338] sm:$0xff]
        %v887 = vld [vmem:[%s1 + $0x340] sm:$0xff]
        %v888 = vld [vmem:[%s1 + $0x348] sm:$0xff]
        %v889 = vld [vmem:[%s1 + $0x350] sm:$0xff]
        %v890 = vld [vmem:[%s1 + $0x358] sm:$0xff]
        %v891 = vld [vmem:[%s1 + $0x360] sm:$0xff]
        %v892 = vld [vmem:[%s1 + $0x368] sm:$0xff]
        %v893 = vld [vmem:[%s1 + $0x370] sm:$0xff]
        %v894 = vld [vmem:[%s1 + $0x378] sm:$0xff]
        %v895 = vld [vmem:[%s1 + $0x380] sm:$0xff]
        %v896 = vld [vmem:[%s1 + $0x388] sm:$0xff]
        %v897 = vld [vmem:[%s1 + $0x390] sm:$0xff]
        %v898 = vld [vmem:[%s1 + $0x398] sm:$0xff]
        %v899 = vld [vmem:[%s1 + $0x3a0] sm:$0xff]
        %v900 = vld [vmem:[%s1 + $0x3a8] sm:$0xff]
        %v901 = vld [vmem:[%s1 + $0x3b0] sm:$0xff]
        %v902 = vld [vmem:[%s1 + $0x3b8] sm:$0xff]
        %v903 = vld [vmem:[%s1 + $0x3c0] sm:$0xff]
        %v904 = vld [vmem:[%s1 + $0x3c8] sm:$0xff]
        %v905 = vld [vmem:[%s1 + $0x3d0] sm:$0xff]
        %v906 = vld [vmem:[%s1 + $0x3d8] sm:$0xff]
        %v907 = vld [vmem:[%s1 + $0x3e0] sm:$0xff]
        %v908 = vld [vmem:[%s1 + $0x3e8] sm:$0xff]
        %v909 = vld [vmem:[%s1 + $0x3f0] sm:$0xff]
        %v910 = vld [vmem:[%s1 + $0x3f8] sm:$0xff]
        %v911 = vld [vmem:[%s1 + $0x400] sm:$0xff]
        %v912 = vld [vmem:[%s1 + $0x408] sm:$0xff]
        %v913 = vld [vmem:[%s1 + $0x410] sm:$0xff]
        %v914 = vld [vmem:[%s1 + $0x418] sm:$0xff]
        %v915 = vld [vmem:[%s1 + $0x420] sm:$0xff]
        %v916 = vld [vmem:[%s1 + $0x428] sm:$0xff]
        %v917 = vld [vmem:[%s1 + $0x430] sm:$0xff]
        %v918 = vld [vmem:[%s1 + $0x438] sm:$0xff]
        %v919 = vld [vmem:[%s1 + $0x440] sm:$0xff]
        %v920 = vld [vmem:[%s1 + $0x448] sm:$0xff]
        %v921 = vld [vmem:[%s1 + $0x450] sm:$0xff]
        %v922 = vld [vmem:[%s1 + $0x458] sm:$0xff]
        %v923 = vld [vmem:[%s1 + $0x460] sm:$0xff]
        %v924 = vld [vmem:[%s1 + $0x468] sm:$0xff]
        %v925 = vld [vmem:[%s1 + $0x470] sm:$0xff]
        %v926 = vld [vmem:[%s1 + $0x478] sm:$0xff]
        %v927 = vld [vmem:[%s1 + $0x480] sm:$0xff]
        %v928 = vld [vmem:[%s1 + $0x488] sm:$0xff]
        %v929 = vld [vmem:[%s1 + $0x490] sm:$0xff]
        %v930 = vld [vmem:[%s1 + $0x498] sm:$0xff]
        %v931 = vld [vmem:[%s1 + $0x4a0] sm:$0xff]
        %v932 = vld [vmem:[%s1 + $0x4a8] sm:$0xff]
        %v933 = vld [vmem:[%s1 + $0x4b0] sm:$0xff]
        %v934 = vld [vmem:[%s1 + $0x4b8] sm:$0xff]
        %v935 = vld [vmem:[%s1 + $0x4c0] sm:$0xff]
        %v936 = vld [vmem:[%s1 + $0x4c8] sm:$0xff]
        %v937 = vld [vmem:[%s1 + $0x4d0] sm:$0xff]
        %v938 = vld [vmem:[%s1 + $0x4d8] sm:$0xff]
        %v939 = vld [vmem:[%s1 + $0x4e0] sm:$0xff]
        %v940 = vld [vmem:[%s1 + $0x4e8] sm:$0xff]
        %v941 = vld [vmem:[%s1 + $0x4f0] sm:$0xff]
        %v942 = vld [vmem:[%s1 + $0x4f8] sm:$0xff]
        %v943 = vld [vmem:[%s1 + $0x500] sm:$0xff]
        %v944 = vld [vmem:[%s1 + $0x508] sm:$0xff]
        %v945 = vld [vmem:[%s1 + $0x510] sm:$0xff]
        %v946 = vld [vmem:[%s1 + $0x518] sm:$0xff]
        %v947 = vld [vmem:[%s1 + $0x520] sm:$0xff]
        %v948 = vld [vmem:[%s1 + $0x528] sm:$0xff]
        %v949 = vld [vmem:[%s1 + $0x530] sm:$0xff]
        %v950 = vld [vmem:[%s1 + $0x538] sm:$0xff]
        %v951 = vld [vmem:[%s1 + $0x540] sm:$0xff]
        %v952 = vld [vmem:[%s1 + $0x548] sm:$0xff]
        %v953 = vld [vmem:[%s1 + $0x550] sm:$0xff]
        %v954 = vld [vmem:[%s1 + $0x558] sm:$0xff]
        %v955 = vld [vmem:[%s1 + $0x560] sm:$0xff]
        %v956 = vld [vmem:[%s1 + $0x568] sm:$0xff]
        %v957 = vld [vmem:[%s1 + $0x570] sm:$0xff]
        %v958 = vld [vmem:[%s1 + $0x578] sm:$0xff]
        %v959 = vld [vmem:[%s1 + $0x580] sm:$0xff]
        %v960 = vld [vmem:[%s1 + $0x588] sm:$0xff]
        %v961 = vld [vmem:[%s1 + $0x590] sm:$0xff]
        %v962 = vld [vmem:[%s1 + $0x598] sm:$0xff]
        %v963 = vld [vmem:[%s1 + $0x5a0] sm:$0xff]
        %v964 = vld [vmem:[%s1 + $0x5a8] sm:$0xff]
        %v965 = vld [vmem:[%s1 + $0x5b0] sm:$0xff]
        %v966 = vld [vmem:[%s1 + $0x5b8] sm:$0xff]
        %v967 = vld [vmem:[%s1 + $0x5c0] sm:$0xff]
        %v968 = vld [vmem:[%s1 + $0x5c8] sm:$0xff]
        %v969 = vld [vmem:[%s1 + $0x5d0] sm:$0xff]
        %v970 = vld [vmem:[%s1 + $0x5d8] sm:$0xff]
        %v971 = vld [vmem:[%s1 + $0x5e0] sm:$0xff]
        %v972 = vld [vmem:[%s1 + $0x5e8] sm:$0xff]
        %v973 = vld [vmem:[%s1 + $0x5f0] sm:$0xff]
        %v974 = vld [vmem:[%s1 + $0x5f8] sm:$0xff]
        %v975 = vld [vmem:[%s1 + $0x600] sm:$0xff]
        %v976 = vld [vmem:[%s1 + $0x608] sm:$0xff]
        %v977 = vld [vmem:[%s1 + $0x610] sm:$0xff]
        %v978 = vld [vmem:[%s1 + $0x618] sm:$0xff]
        %v979 = vld [vmem:[%s1 + $0x620] sm:$0xff]
        %v980 = vld [vmem:[%s1 + $0x628] sm:$0xff]
        %v981 = vld [vmem:[%s1 + $0x630] sm:$0xff]
        %v982 = vld [vmem:[%s1 + $0x638] sm:$0xff]
        %v983 = vld [vmem:[%s1 + $0x640] sm:$0xff]
        %v984 = vld [vmem:[%s1 + $0x648] sm:$0xff]
        %v985 = vld [vmem:[%s1 + $0x650] sm:$0xff]
        %v986 = vld [vmem:[%s1 + $0x658] sm:$0xff]
        %v987 = vld [vmem:[%s1 + $0x660] sm:$0xff]
        %v988 = vld [vmem:[%s1 + $0x668] sm:$0xff]
        %v989 = vld [vmem:[%s1 + $0x670] sm:$0xff]
        %v990 = vld [vmem:[%s1 + $0x678] sm:$0xff]
        %v991 = vld [vmem:[%s1 + $0x680] sm:$0xff]
        %v992 = vld [vmem:[%s1 + $0x688] sm:$0xff]
        %v993 = vld [vmem:[%s1 + $0x690] sm:$0xff]
        %v994 = vld [vmem:[%s1 + $0x698] sm:$0xff]
        %v995 = vld [vmem:[%s1 + $0x6a0] sm:$0xff]
        %v996 = vld [vmem:[%s1 + $0x6a8] sm:$0xff]
        %v997 = vld [vmem:[%s1 + $0x6b0] sm:$0xff]
        %v998 = vld [vmem:[%s1 + $0x6b8] sm:$0xff]
        %v999 = vld [vmem:[%s1 + $0x6c0] sm:$0xff]
        %v1000 = vld [vmem:[%s1 + $0x6c8] sm:$0xff]
        %v1001 = vld [vmem:[%s1 + $0x6d0] sm:$0xff]
        %v1002 = vld [vmem:[%s1 + $0x6d8] sm:$0xff]
        %v1003 = vld [vmem:[%s1 + $0x6e0] sm:$0xff]
        %v1004 = vld [vmem:[%s1 + $0x6e8] sm:$0xff]
        %v1005 = vld [vmem:[%s1 + $0x6f0] sm:$0xff]
        %v1006 = vld [vmem:[%s1 + $0x6f8] sm:$0xff]
        %v1007 = vld [vmem:[%s1 + $0x700] sm:$0xff]
        %v1008 = vld [vmem:[%s1 + $0x708] sm:$0xff]
        %v1009 = vld [vmem:[%s1 + $0x710] sm:$0xff]
        %v1010 = vld [vmem:[%s1 + $0x718] sm:$0xff]
        %v1011 = vld [vmem:[%s1 + $0x720] sm:$0xff]
        %v1012 = vld [vmem:[%s1 + $0x728] sm:$0xff]
        %v1013 = vld [vmem:[%s1 + $0x730] sm:$0xff]
        %v1014 = vld [vmem:[%s1 + $0x738] sm:$0xff]
        %v1015 = vld [vmem:[%s1 + $0x740] sm:$0xff]
        %v1016 = vld [vmem:[%s1 + $0x748] sm:$0xff]
        %v1017 = vld [vmem:[%s1 + $0x750] sm:$0xff]
        %v1018 = vld [vmem:[%s1 + $0x758] sm:$0xff]
        %v1019 = vld [vmem:[%s1 + $0x760] sm:$0xff]
        %v1020 = vld [vmem:[%s1 + $0x768] sm:$0xff]
        %v1021 = vld [vmem:[%s1 + $0x770] sm:$0xff]
        %v1022 = vld [vmem:[%s1 + $0x778] sm:$0xff]
        %v1023 = vld [vmem:[%s1 + $0x780] sm:$0xff]
        %v1024 = vld [vmem:[%s1 + $0x788] sm:$0xff]
        %v1025 = vld [vmem:[%s1 + $0x790] sm:$0xff]
        %v1026 = vld [vmem:[%s1 + $0x798] sm:$0xff]
        %v1027 = vld [vmem:[%s1 + $0x7a0] sm:$0xff]
        %v1028 = vld [vmem:[%s1 + $0x7a8] sm:$0xff]
        %v1029 = vld [vmem:[%s1 + $0x7b0] sm:$0xff]
        %v1030 = vld [vmem:[%s1 + $0x7b8] sm:$0xff]
        %v1031 = vld [vmem:[%s1 + $0x7c0] sm:$0xff]
        %v1032 = vld [vmem:[%s1 + $0x7c8] sm:$0xff]
        %v1033 = vld [vmem:[%s1 + $0x7d0] sm:$0xff]
        %v1034 = vld [vmem:[%s1 + $0x7d8] sm:$0xff]
        %v1035 = vld [vmem:[%s1 + $0x7e0] sm:$0xff]
        %v1036 = vld [vmem:[%s1 + $0x7e8] sm:$0xff]
        %v1037 = vld [vmem:[%s1 + $0x7f0] sm:$0xff]
        %v1038 = vld [vmem:[%s1 + $0x7f8] sm:$0xff]
        %v1039 = vld [vmem:[%s1 + $0x800] sm:$0xff]
        %v1040 = vld [vmem:[%s1 + $0x808] sm:$0xff]
        %v1041 = vld [vmem:[%s1 + $0x810] sm:$0xff]
        %v1042 = vld [vmem:[%s1 + $0x818] sm:$0xff]
        %v1043 = vld [vmem:[%s1 + $0x820] sm:$0xff]
        %v1044 = vld [vmem:[%s1 + $0x828] sm:$0xff]
        %v1045 = vld [vmem:[%s1 + $0x830] sm:$0xff]
        %v1046 = vld [vmem:[%s1 + $0x838] sm:$0xff]
        %v1047 = vld [vmem:[%s1 + $0x840] sm:$0xff]
        %v1048 = vld [vmem:[%s1 + $0x848] sm:$0xff]
        %v1049 = vld [vmem:[%s1 + $0x850] sm:$0xff]
        %v1050 = vld [vmem:[%s1 + $0x858] sm:$0xff]
        %v1051 = vld [vmem:[%s1 + $0x860] sm:$0xff]
        %v1052 = vld [vmem:[%s1 + $0x868] sm:$0xff]
        %v1053 = vld [vmem:[%s1 + $0x870] sm:$0xff]
        %v1054 = vld [vmem:[%s1 + $0x878] sm:$0xff]
        %v1055 = vld [vmem:[%s1 + $0x880] sm:$0xff]
        %v1056 = vld [vmem:[%s1 + $0x888] sm:$0xff]
        %v1057 = vld [vmem:[%s1 + $0x890] sm:$0xff]
        %v1058 = vld [vmem:[%s1 + $0x898] sm:$0xff]
        %v1059 = vld [vmem:[%s1 + $0x8a0] sm:$0xff]
        %v1060 = vld [vmem:[%s1 + $0x8a8] sm:$0xff]
        %v1061 = vld [vmem:[%s1 + $0x8b0] sm:$0xff]
        %v1062 = vld [vmem:[%s1 + $0x8b8] sm:$0xff]
        %v1063 = vld [vmem:[%s1 + $0x8c0] sm:$0xff]
        %v1064 = vld [vmem:[%s1 + $0x8c8] sm:$0xff]
        %v1065 = vld [vmem:[%s1 + $0x8d0] sm:$0xff]
        %v1066 = vld [vmem:[%s1 + $0x8d8] sm:$0xff]
        %v1067 = vld [vmem:[%s1 + $0x8e0] sm:$0xff]
        %v1068 = vld [vmem:[%s1 + $0x8e8] sm:$0xff]
        %v1069 = vld [vmem:[%s1 + $0x8f0] sm:$0xff]
        %v1070 = vld [vmem:[%s1 + $0x8f8] sm:$0xff]
        %v1071 = vld [vmem:[%s1 + $0x900] sm:$0xff]
        %v1072 = vld [vmem:[%s1 + $0x908] sm:$0xff]
        %v1073 = vld [vmem:[%s1 + $0x910] sm:$0xff]
        %v1074 = vld [vmem:[%s1 + $0x918] sm:$0xff]
        %v1075 = vld [vmem:[%s1 + $0x920] sm:$0xff]
        %v1076 = vld [vmem:[%s1 + $0x928] sm:$0xff]
        %v1077 = vld [vmem:[%s1 + $0x930] sm:$0xff]
        %v1078 = vld [vmem:[%s1 + $0x938] sm:$0xff]
        %v1079 = vld [vmem:[%s1 + $0x940] sm:$0xff]
        %v1080 = vld [vmem:[%s1 + $0x948] sm:$0xff]
        %v1081 = vld [vmem:[%s1 + $0x950] sm:$0xff]
        %v1082 = vld [vmem:[%s1 + $0x958] sm:$0xff]
        %v1083 = vld [vmem:[%s1 + $0x960] sm:$0xff]
        %v1084 = vld [vmem:[%s1 + $0x968] sm:$0xff]
        %v1085 = vld [vmem:[%s1 + $0x970] sm:$0xff]
        %v1086 = vld [vmem:[%s1 + $0x978] sm:$0xff]
        %v1087 = vld [vmem:[%s1 + $0x980] sm:$0xff]
        %v1088 = vld [vmem:[%s1 + $0x988] sm:$0xff]
        %v1089 = vld [vmem:[%s1 + $0x990] sm:$0xff]
        %v1090 = vld [vmem:[%s1 + $0x998] sm:$0xff]
        %v1091 = vld [vmem:[%s1 + $0x9a0] sm:$0xff]
        %v1092 = vld [vmem:[%s1 + $0x9a8] sm:$0xff]
        %v1093 = vld [vmem:[%s1 + $0x9b0] sm:$0xff]
        %v1094 = vld [vmem:[%s1 + $0x9b8] sm:$0xff]
        %v1095 = vld [vmem:[%s1 + $0x9c0] sm:$0xff]
        %v1096 = vld [vmem:[%s1 + $0x9c8] sm:$0xff]
        %v1097 = vld [vmem:[%s1 + $0x9d0] sm:$0xff]
        %v1098 = vld [vmem:[%s1 + $0x9d8] sm:$0xff]
        %v1099 = vld [vmem:[%s1 + $0x9e0] sm:$0xff]
        %v1100 = vld [vmem:[%s1 + $0x9e8] sm:$0xff]
        %v1101 = vld [vmem:[%s1 + $0x9f0] sm:$0xff]
        %v1102 = vld [vmem:[%s1 + $0x9f8] sm:$0xff]
        %v1103 = vld [vmem:[%s1 + $0xa00] sm:$0xff]
        %v1104 = vld [vmem:[%s1 + $0xa08] sm:$0xff]
        %v1105 = vld [vmem:[%s1 + $0xa10] sm:$0xff]
        %v1106 = vld [vmem:[%s1 + $0xa18] sm:$0xff]
        %v1107 = vld [vmem:[%s1 + $0xa20] sm:$0xff]
        %v1108 = vld [vmem:[%s1 + $0xa28] sm:$0xff]
        %v1109 = vld [vmem:[%s1 + $0xa30] sm:$0xff]
        %v1110 = vld [vmem:[%s1 + $0xa38] sm:$0xff]
        %v1111 = vld [vmem:[%s1 + $0xa40] sm:$0xff]
        %v1112 = vld [vmem:[%s1 + $0xa48] sm:$0xff]
        %v1113 = vld [vmem:[%s1 + $0xa50] sm:$0xff]
        %v1114 = vld [vmem:[%s1 + $0xa58] sm:$0xff]
        %v1115 = vld [vmem:[%s1 + $0xa60] sm:$0xff]
        %v1116 = vld [vmem:[%s1 + $0xa68] sm:$0xff]
        %v1117 = vld [vmem:[%s1 + $0xa70] sm:$0xff]
        %v1118 = vld [vmem:[%s1 + $0xa78] sm:$0xff]
        %v1119 = vld [vmem:[%s1 + $0xa80] sm:$0xff]
        %v1120 = vld [vmem:[%s1 + $0xa88] sm:$0xff]
        %v1121 = vld [vmem:[%s1 + $0xa90] sm:$0xff]
        %v1122 = vld [vmem:[%s1 + $0xa98] sm:$0xff]
        %v1123 = vld [vmem:[%s1 + $0xaa0] sm:$0xff]
        %v1124 = vld [vmem:[%s1 + $0xaa8] sm:$0xff]
        %v1125 = vld [vmem:[%s1 + $0xab0] sm:$0xff]
        %v1126 = vld [vmem:[%s1 + $0xab8] sm:$0xff]
        %v1127 = vld [vmem:[%s1 + $0xac0] sm:$0xff]
        %v1128 = vld [vmem:[%s1 + $0xac8] sm:$0xff]
        %v1129 = vld [vmem:[%s1 + $0xad0] sm:$0xff]
        %v1130 = vld [vmem:[%s1 + $0xad8] sm:$0xff]
        %v1131 = vld [vmem:[%s1 + $0xae0] sm:$0xff]
        %v1132 = vld [vmem:[%s1 + $0xae8] sm:$0xff]
        %v1133 = vld [vmem:[%s1 + $0xaf0] sm:$0xff]
        %v1134 = vld [vmem:[%s1 + $0xaf8] sm:$0xff]
        %v1135 = vld [vmem:[%s1 + $0xb00] sm:$0xff]
        %v1136 = vld [vmem:[%s1 + $0xb08] sm:$0xff]
        %v1137 = vld [vmem:[%s1 + $0xb10] sm:$0xff]
        %v1138 = vld [vmem:[%s1 + $0xb18] sm:$0xff]
        %v1139 = vld [vmem:[%s1 + $0xb20] sm:$0xff]
        %v1140 = vld [vmem:[%s1 + $0xb28] sm:$0xff]
        %v1141 = vld [vmem:[%s1 + $0xb30] sm:$0xff]
        %v1142 = vld [vmem:[%s1 + $0xb38] sm:$0xff]
        %v1143 = vld [vmem:[%s1 + $0xb40] sm:$0xff]
        %v1144 = vld [vmem:[%s1 + $0xb48] sm:$0xff]
        %v1145 = vld [vmem:[%s1 + $0xb50] sm:$0xff]
        %v1146 = vld [vmem:[%s1 + $0xb58] sm:$0xff]
        %v1147 = vld [vmem:[%s1 + $0xb60] sm:$0xff]
        %v1148 = vld [vmem:[%s1 + $0xb68] sm:$0xff]
        %v1149 = vld [vmem:[%s1 + $0xb70] sm:$0xff]
        %v1150 = vld [vmem:[%s1 + $0xb78] sm:$0xff]
        %v1151 = vld [vmem:[%s1 + $0xb80] sm:$0xff]
        %v1152 = vld [vmem:[%s1 + $0xb88] sm:$0xff]
        %v1153 = vld [vmem:[%s1 + $0xb90] sm:$0xff]
        %v1154 = vld [vmem:[%s1 + $0xb98] sm:$0xff]
        %v1155 = vld [vmem:[%s1 + $0xba0] sm:$0xff]
        %v1156 = vld [vmem:[%s1 + $0xba8] sm:$0xff]
        %v1157 = vld [vmem:[%s1 + $0xbb0] sm:$0xff]
        %v1158 = vld [vmem:[%s1 + $0xbb8] sm:$0xff]
        %v1159 = vld [vmem:[%s1 + $0xbc0] sm:$0xff]
        %v1160 = vld [vmem:[%s1 + $0xbc8] sm:$0xff]
        %v1161 = vld [vmem:[%s1 + $0xbd0] sm:$0xff]
        %v1162 = vld [vmem:[%s1 + $0xbd8] sm:$0xff]
        %v1163 = vld [vmem:[%s1 + $0xbe0] sm:$0xff]
        %v1164 = vld [vmem:[%s1 + $0xbe8] sm:$0xff]
        %v1165 = vld [vmem:[%s1 + $0xbf0] sm:$0xff]
        %v1166 = vld [vmem:[%s1 + $0xbf8] sm:$0xff]
        %v1551 = vunpack.c.l.b16 %v783
        %v1552 = vunpack.c.h.b16 %v783
        %v1553 = vunpack.c.l.b16 %v784
        %v1554 = vunpack.c.h.b16 %v784
        %v1555 = vunpack.c.l.b16 %v785
        %v1556 = vunpack.c.h.b16 %v785
        %v1557 = vunpack.c.l.b16 %v786
        %v1558 = vunpack.c.h.b16 %v786
        %v1559 = vunpack.c.l.b16 %v787
        %v1560 = vunpack.c.h.b16 %v787
        %v1561 = vunpack.c.l.b16 %v788
        %v1562 = vunpack.c.h.b16 %v788
        %v1563 = vunpack.c.l.b16 %v789
        %v1564 = vunpack.c.h.b16 %v789
        %v1565 = vunpack.c.l.b16 %v790
        %v1566 = vunpack.c.h.b16 %v790
        %v1567 = vunpack.c.l.b16 %v791
        %v1568 = vunpack.c.h.b16 %v791
        %v1569 = vunpack.c.l.b16 %v792
        %v1570 = vunpack.c.h.b16 %v792
        %v1571 = vunpack.c.l.b16 %v793
        %v1572 = vunpack.c.h.b16 %v793
        %v1573 = vunpack.c.l.b16 %v794
        %v1574 = vunpack.c.h.b16 %v794
        %v1575 = vunpack.c.l.b16 %v795
        %v1576 = vunpack.c.h.b16 %v795
        %v1577 = vunpack.c.l.b16 %v796
        %v1578 = vunpack.c.h.b16 %v796
        %v1579 = vunpack.c.l.b16 %v797
        %v1580 = vunpack.c.h.b16 %v797
        %v1581 = vunpack.c.l.b16 %v798
        %v1582 = vunpack.c.h.b16 %v798
        %v1583 = vunpack.c.l.b16 %v799
        %v1584 = vunpack.c.h.b16 %v799
        %v1585 = vunpack.c.l.b16 %v800
        %v1586 = vunpack.c.h.b16 %v800
        %v1587 = vunpack.c.l.b16 %v801
        %v1588 = vunpack.c.h.b16 %v801
        %v1589 = vunpack.c.l.b16 %v802
        %v1590 = vunpack.c.h.b16 %v802
        %v1591 = vunpack.c.l.b16 %v803
        %v1592 = vunpack.c.h.b16 %v803
        %v1593 = vunpack.c.l.b16 %v804
        %v1594 = vunpack.c.h.b16 %v804
        %v1595 = vunpack.c.l.b16 %v805
        %v1596 = vunpack.c.h.b16 %v805
        %v1597 = vunpack.c.l.b16 %v806
        %v1598 = vunpack.c.h.b16 %v806
        %v1599 = vunpack.c.l.b16 %v807
        %v1600 = vunpack.c.h.b16 %v807
        %v1601 = vunpack.c.l.b16 %v808
        %v1602 = vunpack.c.h.b16 %v808
        %v1603 = vunpack.c.l.b16 %v809
        %v1604 = vunpack.c.h.b16 %v809
        %v1605 = vunpack.c.l.b16 %v810
        %v1606 = vunpack.c.h.b16 %v810
        %v1607 = vunpack.c.l.b16 %v811
        %v1608 = vunpack.c.h.b16 %v811
        %v1609 = vunpack.c.l.b16 %v812
        %v1610 = vunpack.c.h.b16 %v812
        %v1611 = vunpack.c.l.b16 %v813
        %v1612 = vunpack.c.h.b16 %v813
        %v1613 = vunpack.c.l.b16 %v814
        %v1614 = vunpack.c.h.b16 %v814
        %v1615 = vunpack.c.l.b16 %v815
        %v1616 = vunpack.c.h.b16 %v815
        %v1617 = vunpack.c.l.b16 %v816
        %v1618 = vunpack.c.h.b16 %v816
        %v1619 = vunpack.c.l.b16 %v817
        %v1620 = vunpack.c.h.b16 %v817
        %v1621 = vunpack.c.l.b16 %v818
        %v1622 = vunpack.c.h.b16 %v818
        %v1623 = vunpack.c.l.b16 %v819
        %v1624 = vunpack.c.h.b16 %v819
        %v1625 = vunpack.c.l.b16 %v820
        %v1626 = vunpack.c.h.b16 %v820
        %v1627 = vunpack.c.l.b16 %v821
        %v1628 = vunpack.c.h.b16 %v821
        %v1629 = vunpack.c.l.b16 %v822
        %v1630 = vunpack.c.h.b16 %v822
        %v1631 = vunpack.c.l.b16 %v823
        %v1632 = vunpack.c.h.b16 %v823
        %v1633 = vunpack.c.l.b16 %v824
        %v1634 = vunpack.c.h.b16 %v824
        %v1635 = vunpack.c.l.b16 %v825
        %v1636 = vunpack.c.h.b16 %v825
        %v1637 = vunpack.c.l.b16 %v826
        %v1638 = vunpack.c.h.b16 %v826
        %v1639 = vunpack.c.l.b16 %v827
        %v1640 = vunpack.c.h.b16 %v827
        %v1641 = vunpack.c.l.b16 %v828
        %v1642 = vunpack.c.h.b16 %v828
        %v1643 = vunpack.c.l.b16 %v829
        %v1644 = vunpack.c.h.b16 %v829
        %v1645 = vunpack.c.l.b16 %v830
        %v1646 = vunpack.c.h.b16 %v830
        %v1647 = vunpack.c.l.b16 %v831
        %v1648 = vunpack.c.h.b16 %v831
        %v1649 = vunpack.c.l.b16 %v832
        %v1650 = vunpack.c.h.b16 %v832
        %v1651 = vunpack.c.l.b16 %v833
        %v1652 = vunpack.c.h.b16 %v833
        %v1653 = vunpack.c.l.b16 %v834
        %v1654 = vunpack.c.h.b16 %v834
        %v1655 = vunpack.c.l.b16 %v835
        %v1656 = vunpack.c.h.b16 %v835
        %v1657 = vunpack.c.l.b16 %v836
        %v1658 = vunpack.c.h.b16 %v836
        %v1659 = vunpack.c.l.b16 %v837
        %v1660 = vunpack.c.h.b16 %v837
        %v1661 = vunpack.c.l.b16 %v838
        %v1662 = vunpack.c.h.b16 %v838
        %v1663 = vunpack.c.l.b16 %v839
        %v1664 = vunpack.c.h.b16 %v839
        %v1665 = vunpack.c.l.b16 %v840
        %v1666 = vunpack.c.h.b16 %v840
        %v1667 = vunpack.c.l.b16 %v841
        %v1668 = vunpack.c.h.b16 %v841
        %v1669 = vunpack.c.l.b16 %v842
        %v1670 = vunpack.c.h.b16 %v842
        %v1671 = vunpack.c.l.b16 %v843
        %v1672 = vunpack.c.h.b16 %v843
        %v1673 = vunpack.c.l.b16 %v844
        %v1674 = vunpack.c.h.b16 %v844
        %v1675 = vunpack.c.l.b16 %v845
        %v1676 = vunpack.c.h.b16 %v845
        %v1677 = vunpack.c.l.b16 %v846
        %v1678 = vunpack.c.h.b16 %v846
        %v1679 = vunpack.c.l.b16 %v847
        %v1680 = vunpack.c.h.b16 %v847
        %v1681 = vunpack.c.l.b16 %v848
        %v1682 = vunpack.c.h.b16 %v848
        %v1683 = vunpack.c.l.b16 %v849
        %v1684 = vunpack.c.h.b16 %v849
        %v1685 = vunpack.c.l.b16 %v850
        %v1686 = vunpack.c.h.b16 %v850
        %v1687 = vunpack.c.l.b16 %v851
        %v1688 = vunpack.c.h.b16 %v851
        %v1689 = vunpack.c.l.b16 %v852
        %v1690 = vunpack.c.h.b16 %v852
        %v1691 = vunpack.c.l.b16 %v853
        %v1692 = vunpack.c.h.b16 %v853
        %v1693 = vunpack.c.l.b16 %v854
        %v1694 = vunpack.c.h.b16 %v854
        %v1695 = vunpack.c.l.b16 %v855
        %v1696 = vunpack.c.h.b16 %v855
        %v1697 = vunpack.c.l.b16 %v856
        %v1698 = vunpack.c.h.b16 %v856
        %v1699 = vunpack.c.l.b16 %v857
        %v1700 = vunpack.c.h.b16 %v857
        %v1701 = vunpack.c.l.b16 %v858
        %v1702 = vunpack.c.h.b16 %v858
        %v1703 = vunpack.c.l.b16 %v859
        %v1704 = vunpack.c.h.b16 %v859
        %v1705 = vunpack.c.l.b16 %v860
        %v1706 = vunpack.c.h.b16 %v860
        %v1707 = vunpack.c.l.b16 %v861
        %v1708 = vunpack.c.h.b16 %v861
        %v1709 = vunpack.c.l.b16 %v862
        %v1710 = vunpack.c.h.b16 %v862
        %v1711 = vunpack.c.l.b16 %v863
        %v1712 = vunpack.c.h.b16 %v863
        %v1713 = vunpack.c.l.b16 %v864
        %v1714 = vunpack.c.h.b16 %v864
        %v1715 = vunpack.c.l.b16 %v865
        %v1716 = vunpack.c.h.b16 %v865
        %v1717 = vunpack.c.l.b16 %v866
        %v1718 = vunpack.c.h.b16 %v866
        %v1719 = vunpack.c.l.b16 %v867
        %v1720 = vunpack.c.h.b16 %v867
        %v1721 = vunpack.c.l.b16 %v868
        %v1722 = vunpack.c.h.b16 %v868
        %v1723 = vunpack.c.l.b16 %v869
        %v1724 = vunpack.c.h.b16 %v869
        %v1725 = vunpack.c.l.b16 %v870
        %v1726 = vunpack.c.h.b16 %v870
        %v1727 = vunpack.c.l.b16 %v871
        %v1728 = vunpack.c.h.b16 %v871
        %v1729 = vunpack.c.l.b16 %v872
        %v1730 = vunpack.c.h.b16 %v872
        %v1731 = vunpack.c.l.b16 %v873
        %v1732 = vunpack.c.h.b16 %v873
        %v1733 = vunpack.c.l.b16 %v874
        %v1734 = vunpack.c.h.b16 %v874
        %v1735 = vunpack.c.l.b16 %v875
        %v1736 = vunpack.c.h.b16 %v875
        %v1737 = vunpack.c.l.b16 %v876
        %v1738 = vunpack.c.h.b16 %v876
        %v1739 = vunpack.c.l.b16 %v877
        %v1740 = vunpack.c.h.b16 %v877
        %v1741 = vunpack.c.l.b16 %v878
        %v1742 = vunpack.c.h.b16 %v878
        %v1743 = vunpack.c.l.b16 %v879
        %v1744 = vunpack.c.h.b16 %v879
        %v1745 = vunpack.c.l.b16 %v880
        %v1746 = vunpack.c.h.b16 %v880
        %v1747 = vunpack.c.l.b16 %v881
        %v1748 = vunpack.c.h.b16 %v881
        %v1749 = vunpack.c.l.b16 %v882
        %v1750 = vunpack.c.h.b16 %v882
        %v1751 = vunpack.c.l.b16 %v883
        %v1752 = vunpack.c.h.b16 %v883
        %v1753 = vunpack.c.l.b16 %v884
        %v1754 = vunpack.c.h.b16 %v884
        %v1755 = vunpack.c.l.b16 %v885
        %v1756 = vunpack.c.h.b16 %v885
        %v1757 = vunpack.c.l.b16 %v886
        %v1758 = vunpack.c.h.b16 %v886
        %v1759 = vunpack.c.l.b16 %v887
        %v1760 = vunpack.c.h.b16 %v887
        %v1761 = vunpack.c.l.b16 %v888
        %v1762 = vunpack.c.h.b16 %v888
        %v1763 = vunpack.c.l.b16 %v889
        %v1764 = vunpack.c.h.b16 %v889
        %v1765 = vunpack.c.l.b16 %v890
        %v1766 = vunpack.c.h.b16 %v890
        %v1767 = vunpack.c.l.b16 %v891
        %v1768 = vunpack.c.h.b16 %v891
        %v1769 = vunpack.c.l.b16 %v892
        %v1770 = vunpack.c.h.b16 %v892
        %v1771 = vunpack.c.l.b16 %v893
        %v1772 = vunpack.c.h.b16 %v893
        %v1773 = vunpack.c.l.b16 %v894
        %v1774 = vunpack.c.h.b16 %v894
        %v1775 = vunpack.c.l.b16 %v895
        %v1776 = vunpack.c.h.b16 %v895
        %v1777 = vunpack.c.l.b16 %v896
        %v1778 = vunpack.c.h.b16 %v896
        %v1779 = vunpack.c.l.b16 %v897
        %v1780 = vunpack.c.h.b16 %v897
        %v1781 = vunpack.c.l.b16 %v898
        %v1782 = vunpack.c.h.b16 %v898
        %v1783 = vunpack.c.l.b16 %v899
        %v1784 = vunpack.c.h.b16 %v899
        %v1785 = vunpack.c.l.b16 %v900
        %v1786 = vunpack.c.h.b16 %v900
        %v1787 = vunpack.c.l.b16 %v901
        %v1788 = vunpack.c.h.b16 %v901
        %v1789 = vunpack.c.l.b16 %v902
        %v1790 = vunpack.c.h.b16 %v902
        %v1791 = vunpack.c.l.b16 %v903
        %v1792 = vunpack.c.h.b16 %v903
        %v1793 = vunpack.c.l.b16 %v904
        %v1794 = vunpack.c.h.b16 %v904
        %v1795 = vunpack.c.l.b16 %v905
        %v1796 = vunpack.c.h.b16 %v905
        %v1797 = vunpack.c.l.b16 %v906
        %v1798 = vunpack.c.h.b16 %v906
        %v1799 = vunpack.c.l.b16 %v907
        %v1800 = vunpack.c.h.b16 %v907
        %v1801 = vunpack.c.l.b16 %v908
        %v1802 = vunpack.c.h.b16 %v908
        %v1803 = vunpack.c.l.b16 %v909
        %v1804 = vunpack.c.h.b16 %v909
        %v1805 = vunpack.c.l.b16 %v910
        %v1806 = vunpack.c.h.b16 %v910
        %v1807 = vunpack.c.l.b16 %v911
        %v1808 = vunpack.c.h.b16 %v911
        %v1809 = vunpack.c.l.b16 %v912
        %v1810 = vunpack.c.h.b16 %v912
        %v1811 = vunpack.c.l.b16 %v913
        %v1812 = vunpack.c.h.b16 %v913
        %v1813 = vunpack.c.l.b16 %v914
        %v1814 = vunpack.c.h.b16 %v914
        %v1815 = vunpack.c.l.b16 %v915
        %v1816 = vunpack.c.h.b16 %v915
        %v1817 = vunpack.c.l.b16 %v916
        %v1818 = vunpack.c.h.b16 %v916
        %v1819 = vunpack.c.l.b16 %v917
        %v1820 = vunpack.c.h.b16 %v917
        %v1821 = vunpack.c.l.b16 %v918
        %v1822 = vunpack.c.h.b16 %v918
        %v1823 = vunpack.c.l.b16 %v919
        %v1824 = vunpack.c.h.b16 %v919
        %v1825 = vunpack.c.l.b16 %v920
        %v1826 = vunpack.c.h.b16 %v920
        %v1827 = vunpack.c.l.b16 %v921
        %v1828 = vunpack.c.h.b16 %v921
        %v1829 = vunpack.c.l.b16 %v922
        %v1830 = vunpack.c.h.b16 %v922
        %v1831 = vunpack.c.l.b16 %v923
        %v1832 = vunpack.c.h.b16 %v923
        %v1833 = vunpack.c.l.b16 %v924
        %v1834 = vunpack.c.h.b16 %v924
        %v1835 = vunpack.c.l.b16 %v925
        %v1836 = vunpack.c.h.b16 %v925
        %v1837 = vunpack.c.l.b16 %v926
        %v1838 = vunpack.c.h.b16 %v926
        %v1839 = vunpack.c.l.b16 %v927
        %v1840 = vunpack.c.h.b16 %v927
        %v1841 = vunpack.c.l.b16 %v928
        %v1842 = vunpack.c.h.b16 %v928
        %v1843 = vunpack.c.l.b16 %v929
        %v1844 = vunpack.c.h.b16 %v929
        %v1845 = vunpack.c.l.b16 %v930
        %v1846 = vunpack.c.h.b16 %v930
        %v1847 = vunpack.c.l.b16 %v931
        %v1848 = vunpack.c.h.b16 %v931
        %v1849 = vunpack.c.l.b16 %v932
        %v1850 = vunpack.c.h.b16 %v932
        %v1851 = vunpack.c.l.b16 %v933
        %v1852 = vunpack.c.h.b16 %v933
        %v1853 = vunpack.c.l.b16 %v934
        %v1854 = vunpack.c.h.b16 %v934
        %v1855 = vunpack.c.l.b16 %v935
        %v1856 = vunpack.c.h.b16 %v935
        %v1857 = vunpack.c.l.b16 %v936
        %v1858 = vunpack.c.h.b16 %v936
        %v1859 = vunpack.c.l.b16 %v937
        %v1860 = vunpack.c.h.b16 %v937
        %v1861 = vunpack.c.l.b16 %v938
        %v1862 = vunpack.c.h.b16 %v938
        %v1863 = vunpack.c.l.b16 %v939
        %v1864 = vunpack.c.h.b16 %v939
        %v1865 = vunpack.c.l.b16 %v940
        %v1866 = vunpack.c.h.b16 %v940
        %v1867 = vunpack.c.l.b16 %v941
        %v1868 = vunpack.c.h.b16 %v941
        %v1869 = vunpack.c.l.b16 %v942
        %v1870 = vunpack.c.h.b16 %v942
        %v1871 = vunpack.c.l.b16 %v943
        %v1872 = vunpack.c.h.b16 %v943
        %v1873 = vunpack.c.l.b16 %v944
        %v1874 = vunpack.c.h.b16 %v944
        %v1875 = vunpack.c.l.b16 %v945
        %v1876 = vunpack.c.h.b16 %v945
        %v1877 = vunpack.c.l.b16 %v946
        %v1878 = vunpack.c.h.b16 %v946
        %v1879 = vunpack.c.l.b16 %v947
        %v1880 = vunpack.c.h.b16 %v947
        %v1881 = vunpack.c.l.b16 %v948
        %v1882 = vunpack.c.h.b16 %v948
        %v1883 = vunpack.c.l.b16 %v949
        %v1884 = vunpack.c.h.b16 %v949
        %v1885 = vunpack.c.l.b16 %v950
        %v1886 = vunpack.c.h.b16 %v950
        %v1887 = vunpack.c.l.b16 %v951
        %v1888 = vunpack.c.h.b16 %v951
        %v1889 = vunpack.c.l.b16 %v952
        %v1890 = vunpack.c.h.b16 %v952
        %v1891 = vunpack.c.l.b16 %v953
        %v1892 = vunpack.c.h.b16 %v953
        %v1893 = vunpack.c.l.b16 %v954
        %v1894 = vunpack.c.h.b16 %v954
        %v1895 = vunpack.c.l.b16 %v955
        %v1896 = vunpack.c.h.b16 %v955
        %v1897 = vunpack.c.l.b16 %v956
        %v1898 = vunpack.c.h.b16 %v956
        %v1899 = vunpack.c.l.b16 %v957
        %v1900 = vunpack.c.h.b16 %v957
        %v1901 = vunpack.c.l.b16 %v958
        %v1902 = vunpack.c.h.b16 %v958
        %v1903 = vunpack.c.l.b16 %v959
        %v1904 = vunpack.c.h.b16 %v959
        %v1905 = vunpack.c.l.b16 %v960
        %v1906 = vunpack.c.h.b16 %v960
        %v1907 = vunpack.c.l.b16 %v961
        %v1908 = vunpack.c.h.b16 %v961
        %v1909 = vunpack.c.l.b16 %v962
        %v1910 = vunpack.c.h.b16 %v962
        %v1911 = vunpack.c.l.b16 %v963
        %v1912 = vunpack.c.h.b16 %v963
        %v1913 = vunpack.c.l.b16 %v964
        %v1914 = vunpack.c.h.b16 %v964
        %v1915 = vunpack.c.l.b16 %v965
        %v1916 = vunpack.c.h.b16 %v965
        %v1917 = vunpack.c.l.b16 %v966
        %v1918 = vunpack.c.h.b16 %v966
        %v1919 = vunpack.c.l.b16 %v967
        %v1920 = vunpack.c.h.b16 %v967
        %v1921 = vunpack.c.l.b16 %v968
        %v1922 = vunpack.c.h.b16 %v968
        %v1923 = vunpack.c.l.b16 %v969
        %v1924 = vunpack.c.h.b16 %v969
        %v1925 = vunpack.c.l.b16 %v970
        %v1926 = vunpack.c.h.b16 %v970
        %v1927 = vunpack.c.l.b16 %v971
        %v1928 = vunpack.c.h.b16 %v971
        %v1929 = vunpack.c.l.b16 %v972
        %v1930 = vunpack.c.h.b16 %v972
        %v1931 = vunpack.c.l.b16 %v973
        %v1932 = vunpack.c.h.b16 %v973
        %v1933 = vunpack.c.l.b16 %v974
        %v1934 = vunpack.c.h.b16 %v974
        %v1935 = vunpack.c.l.b16 %v975
        %v1936 = vunpack.c.h.b16 %v975
        %v1937 = vunpack.c.l.b16 %v976
        %v1938 = vunpack.c.h.b16 %v976
        %v1939 = vunpack.c.l.b16 %v977
        %v1940 = vunpack.c.h.b16 %v977
        %v1941 = vunpack.c.l.b16 %v978
        %v1942 = vunpack.c.h.b16 %v978
        %v1943 = vunpack.c.l.b16 %v979
        %v1944 = vunpack.c.h.b16 %v979
        %v1945 = vunpack.c.l.b16 %v980
        %v1946 = vunpack.c.h.b16 %v980
        %v1947 = vunpack.c.l.b16 %v981
        %v1948 = vunpack.c.h.b16 %v981
        %v1949 = vunpack.c.l.b16 %v982
        %v1950 = vunpack.c.h.b16 %v982
        %v1951 = vunpack.c.l.b16 %v983
        %v1952 = vunpack.c.h.b16 %v983
        %v1953 = vunpack.c.l.b16 %v984
        %v1954 = vunpack.c.h.b16 %v984
        %v1955 = vunpack.c.l.b16 %v985
        %v1956 = vunpack.c.h.b16 %v985
        %v1957 = vunpack.c.l.b16 %v986
        %v1958 = vunpack.c.h.b16 %v986
        %v1959 = vunpack.c.l.b16 %v987
        %v1960 = vunpack.c.h.b16 %v987
        %v1961 = vunpack.c.l.b16 %v988
        %v1962 = vunpack.c.h.b16 %v988
        %v1963 = vunpack.c.l.b16 %v989
        %v1964 = vunpack.c.h.b16 %v989
        %v1965 = vunpack.c.l.b16 %v990
        %v1966 = vunpack.c.h.b16 %v990
        %v1967 = vunpack.c.l.b16 %v991
        %v1968 = vunpack.c.h.b16 %v991
        %v1969 = vunpack.c.l.b16 %v992
        %v1970 = vunpack.c.h.b16 %v992
        %v1971 = vunpack.c.l.b16 %v993
        %v1972 = vunpack.c.h.b16 %v993
        %v1973 = vunpack.c.l.b16 %v994
        %v1974 = vunpack.c.h.b16 %v994
        %v1975 = vunpack.c.l.b16 %v995
        %v1976 = vunpack.c.h.b16 %v995
        %v1977 = vunpack.c.l.b16 %v996
        %v1978 = vunpack.c.h.b16 %v996
        %v1979 = vunpack.c.l.b16 %v997
        %v1980 = vunpack.c.h.b16 %v997
        %v1981 = vunpack.c.l.b16 %v998
        %v1982 = vunpack.c.h.b16 %v998
        %v1983 = vunpack.c.l.b16 %v999
        %v1984 = vunpack.c.h.b16 %v999
        %v1985 = vunpack.c.l.b16 %v1000
        %v1986 = vunpack.c.h.b16 %v1000
        %v1987 = vunpack.c.l.b16 %v1001
        %v1988 = vunpack.c.h.b16 %v1001
        %v1989 = vunpack.c.l.b16 %v1002
        %v1990 = vunpack.c.h.b16 %v1002
        %v1991 = vunpack.c.l.b16 %v1003
        %v1992 = vunpack.c.h.b16 %v1003
        %v1993 = vunpack.c.l.b16 %v1004
        %v1994 = vunpack.c.h.b16 %v1004
        %v1995 = vunpack.c.l.b16 %v1005
        %v1996 = vunpack.c.h.b16 %v1005
        %v1997 = vunpack.c.l.b16 %v1006
        %v1998 = vunpack.c.h.b16 %v1006
        %v1999 = vunpack.c.l.b16 %v1007
        %v2000 = vunpack.c.h.b16 %v1007
        %v2001 = vunpack.c.l.b16 %v1008
        %v2002 = vunpack.c.h.b16 %v1008
        %v2003 = vunpack.c.l.b16 %v1009
        %v2004 = vunpack.c.h.b16 %v1009
        %v2005 = vunpack.c.l.b16 %v1010
        %v2006 = vunpack.c.h.b16 %v1010
        %v2007 = vunpack.c.l.b16 %v1011
        %v2008 = vunpack.c.h.b16 %v1011
        %v2009 = vunpack.c.l.b16 %v1012
        %v2010 = vunpack.c.h.b16 %v1012
        %v2011 = vunpack.c.l.b16 %v1013
        %v2012 = vunpack.c.h.b16 %v1013
        %v2013 = vunpack.c.l.b16 %v1014
        %v2014 = vunpack.c.h.b16 %v1014
        %v2015 = vunpack.c.l.b16 %v1015
        %v2016 = vunpack.c.h.b16 %v1015
        %v2017 = vunpack.c.l.b16 %v1016
        %v2018 = vunpack.c.h.b16 %v1016
        %v2019 = vunpack.c.l.b16 %v1017
        %v2020 = vunpack.c.h.b16 %v1017
        %v2021 = vunpack.c.l.b16 %v1018
        %v2022 = vunpack.c.h.b16 %v1018
        %v2023 = vunpack.c.l.b16 %v1019
        %v2024 = vunpack.c.h.b16 %v1019
        %v2025 = vunpack.c.l.b16 %v1020
        %v2026 = vunpack.c.h.b16 %v1020
        %v2027 = vunpack.c.l.b16 %v1021
        %v2028 = vunpack.c.h.b16 %v1021
        %v2029 = vunpack.c.l.b16 %v1022
        %v2030 = vunpack.c.h.b16 %v1022
        %v2031 = vunpack.c.l.b16 %v1023
        %v2032 = vunpack.c.h.b16 %v1023
        %v2033 = vunpack.c.l.b16 %v1024
        %v2034 = vunpack.c.h.b16 %v1024
        %v2035 = vunpack.c.l.b16 %v1025
        %v2036 = vunpack.c.h.b16 %v1025
        %v2037 = vunpack.c.l.b16 %v1026
        %v2038 = vunpack.c.h.b16 %v1026
        %v2039 = vunpack.c.l.b16 %v1027
        %v2040 = vunpack.c.h.b16 %v1027
        %v2041 = vunpack.c.l.b16 %v1028
        %v2042 = vunpack.c.h.b16 %v1028
        %v2043 = vunpack.c.l.b16 %v1029
        %v2044 = vunpack.c.h.b16 %v1029
        %v2045 = vunpack.c.l.b16 %v1030
        %v2046 = vunpack.c.h.b16 %v1030
        %v2047 = vunpack.c.l.b16 %v1031
        %v2048 = vunpack.c.h.b16 %v1031
        %v2049 = vunpack.c.l.b16 %v1032
        %v2050 = vunpack.c.h.b16 %v1032
        %v2051 = vunpack.c.l.b16 %v1033
        %v2052 = vunpack.c.h.b16 %v1033
        %v2053 = vunpack.c.l.b16 %v1034
        %v2054 = vunpack.c.h.b16 %v1034
        %v2055 = vunpack.c.l.b16 %v1035
        %v2056 = vunpack.c.h.b16 %v1035
        %v2057 = vunpack.c.l.b16 %v1036
        %v2058 = vunpack.c.h.b16 %v1036
        %v2059 = vunpack.c.l.b16 %v1037
        %v2060 = vunpack.c.h.b16 %v1037
        %v2061 = vunpack.c.l.b16 %v1038
        %v2062 = vunpack.c.h.b16 %v1038
        %v2063 = vunpack.c.l.b16 %v1039
        %v2064 = vunpack.c.h.b16 %v1039
        %v2065 = vunpack.c.l.b16 %v1040
        %v2066 = vunpack.c.h.b16 %v1040
        %v2067 = vunpack.c.l.b16 %v1041
        %v2068 = vunpack.c.h.b16 %v1041
        %v2069 = vunpack.c.l.b16 %v1042
        %v2070 = vunpack.c.h.b16 %v1042
        %v2071 = vunpack.c.l.b16 %v1043
        %v2072 = vunpack.c.h.b16 %v1043
        %v2073 = vunpack.c.l.b16 %v1044
        %v2074 = vunpack.c.h.b16 %v1044
        %v2075 = vunpack.c.l.b16 %v1045
        %v2076 = vunpack.c.h.b16 %v1045
        %v2077 = vunpack.c.l.b16 %v1046
        %v2078 = vunpack.c.h.b16 %v1046
        %v2079 = vunpack.c.l.b16 %v1047
        %v2080 = vunpack.c.h.b16 %v1047
        %v2081 = vunpack.c.l.b16 %v1048
        %v2082 = vunpack.c.h.b16 %v1048
        %v2083 = vunpack.c.l.b16 %v1049
        %v2084 = vunpack.c.h.b16 %v1049
        %v2085 = vunpack.c.l.b16 %v1050
        %v2086 = vunpack.c.h.b16 %v1050
        %v2087 = vunpack.c.l.b16 %v1051
        %v2088 = vunpack.c.h.b16 %v1051
        %v2089 = vunpack.c.l.b16 %v1052
        %v2090 = vunpack.c.h.b16 %v1052
        %v2091 = vunpack.c.l.b16 %v1053
        %v2092 = vunpack.c.h.b16 %v1053
        %v2093 = vunpack.c.l.b16 %v1054
        %v2094 = vunpack.c.h.b16 %v1054
        %v2095 = vunpack.c.l.b16 %v1055
        %v2096 = vunpack.c.h.b16 %v1055
        %v2097 = vunpack.c.l.b16 %v1056
        %v2098 = vunpack.c.h.b16 %v1056
        %v2099 = vunpack.c.l.b16 %v1057
        %v2100 = vunpack.c.h.b16 %v1057
        %v2101 = vunpack.c.l.b16 %v1058
        %v2102 = vunpack.c.h.b16 %v1058
        %v2103 = vunpack.c.l.b16 %v1059
        %v2104 = vunpack.c.h.b16 %v1059
        %v2105 = vunpack.c.l.b16 %v1060
        %v2106 = vunpack.c.h.b16 %v1060
        %v2107 = vunpack.c.l.b16 %v1061
        %v2108 = vunpack.c.h.b16 %v1061
        %v2109 = vunpack.c.l.b16 %v1062
        %v2110 = vunpack.c.h.b16 %v1062
        %v2111 = vunpack.c.l.b16 %v1063
        %v2112 = vunpack.c.h.b16 %v1063
        %v2113 = vunpack.c.l.b16 %v1064
        %v2114 = vunpack.c.h.b16 %v1064
        %v2115 = vunpack.c.l.b16 %v1065
        %v2116 = vunpack.c.h.b16 %v1065
        %v2117 = vunpack.c.l.b16 %v1066
        %v2118 = vunpack.c.h.b16 %v1066
        %v2119 = vunpack.c.l.b16 %v1067
        %v2120 = vunpack.c.h.b16 %v1067
        %v2121 = vunpack.c.l.b16 %v1068
        %v2122 = vunpack.c.h.b16 %v1068
        %v2123 = vunpack.c.l.b16 %v1069
        %v2124 = vunpack.c.h.b16 %v1069
        %v2125 = vunpack.c.l.b16 %v1070
        %v2126 = vunpack.c.h.b16 %v1070
        %v2127 = vunpack.c.l.b16 %v1071
        %v2128 = vunpack.c.h.b16 %v1071
        %v2129 = vunpack.c.l.b16 %v1072
        %v2130 = vunpack.c.h.b16 %v1072
        %v2131 = vunpack.c.l.b16 %v1073
        %v2132 = vunpack.c.h.b16 %v1073
        %v2133 = vunpack.c.l.b16 %v1074
        %v2134 = vunpack.c.h.b16 %v1074
        %v2135 = vunpack.c.l.b16 %v1075
        %v2136 = vunpack.c.h.b16 %v1075
        %v2137 = vunpack.c.l.b16 %v1076
        %v2138 = vunpack.c.h.b16 %v1076
        %v2139 = vunpack.c.l.b16 %v1077
        %v2140 = vunpack.c.h.b16 %v1077
        %v2141 = vunpack.c.l.b16 %v1078
        %v2142 = vunpack.c.h.b16 %v1078
        %v2143 = vunpack.c.l.b16 %v1079
        %v2144 = vunpack.c.h.b16 %v1079
        %v2145 = vunpack.c.l.b16 %v1080
        %v2146 = vunpack.c.h.b16 %v1080
        %v2147 = vunpack.c.l.b16 %v1081
        %v2148 = vunpack.c.h.b16 %v1081
        %v2149 = vunpack.c.l.b16 %v1082
        %v2150 = vunpack.c.h.b16 %v1082
        %v2151 = vunpack.c.l.b16 %v1083
        %v2152 = vunpack.c.h.b16 %v1083
        %v2153 = vunpack.c.l.b16 %v1084
        %v2154 = vunpack.c.h.b16 %v1084
        %v2155 = vunpack.c.l.b16 %v1085
        %v2156 = vunpack.c.h.b16 %v1085
        %v2157 = vunpack.c.l.b16 %v1086
        %v2158 = vunpack.c.h.b16 %v1086
        %v2159 = vunpack.c.l.b16 %v1087
        %v2160 = vunpack.c.h.b16 %v1087
        %v2161 = vunpack.c.l.b16 %v1088
        %v2162 = vunpack.c.h.b16 %v1088
        %v2163 = vunpack.c.l.b16 %v1089
        %v2164 = vunpack.c.h.b16 %v1089
        %v2165 = vunpack.c.l.b16 %v1090
        %v2166 = vunpack.c.h.b16 %v1090
        %v2167 = vunpack.c.l.b16 %v1091
        %v2168 = vunpack.c.h.b16 %v1091
        %v2169 = vunpack.c.l.b16 %v1092
        %v2170 = vunpack.c.h.b16 %v1092
        %v2171 = vunpack.c.l.b16 %v1093
        %v2172 = vunpack.c.h.b16 %v1093
        %v2173 = vunpack.c.l.b16 %v1094
        %v2174 = vunpack.c.h.b16 %v1094
        %v2175 = vunpack.c.l.b16 %v1095
        %v2176 = vunpack.c.h.b16 %v1095
        %v2177 = vunpack.c.l.b16 %v1096
        %v2178 = vunpack.c.h.b16 %v1096
        %v2179 = vunpack.c.l.b16 %v1097
        %v2180 = vunpack.c.h.b16 %v1097
        %v2181 = vunpack.c.l.b16 %v1098
        %v2182 = vunpack.c.h.b16 %v1098
        %v2183 = vunpack.c.l.b16 %v1099
        %v2184 = vunpack.c.h.b16 %v1099
        %v2185 = vunpack.c.l.b16 %v1100
        %v2186 = vunpack.c.h.b16 %v1100
        %v2187 = vunpack.c.l.b16 %v1101
        %v2188 = vunpack.c.h.b16 %v1101
        %v2189 = vunpack.c.l.b16 %v1102
        %v2190 = vunpack.c.h.b16 %v1102
        %v2191 = vunpack.c.l.b16 %v1103
        %v2192 = vunpack.c.h.b16 %v1103
        %v2193 = vunpack.c.l.b16 %v1104
        %v2194 = vunpack.c.h.b16 %v1104
        %v2195 = vunpack.c.l.b16 %v1105
        %v2196 = vunpack.c.h.b16 %v1105
        %v2197 = vunpack.c.l.b16 %v1106
        %v2198 = vunpack.c.h.b16 %v1106
        %v2199 = vunpack.c.l.b16 %v1107
        %v2200 = vunpack.c.h.b16 %v1107
        %v2201 = vunpack.c.l.b16 %v1108
        %v2202 = vunpack.c.h.b16 %v1108
        %v2203 = vunpack.c.l.b16 %v1109
        %v2204 = vunpack.c.h.b16 %v1109
        %v2205 = vunpack.c.l.b16 %v1110
        %v2206 = vunpack.c.h.b16 %v1110
        %v2207 = vunpack.c.l.b16 %v1111
        %v2208 = vunpack.c.h.b16 %v1111
        %v2209 = vunpack.c.l.b16 %v1112
        %v2210 = vunpack.c.h.b16 %v1112
        %v2211 = vunpack.c.l.b16 %v1113
        %v2212 = vunpack.c.h.b16 %v1113
        %v2213 = vunpack.c.l.b16 %v1114
        %v2214 = vunpack.c.h.b16 %v1114
        %v2215 = vunpack.c.l.b16 %v1115
        %v2216 = vunpack.c.h.b16 %v1115
        %v2217 = vunpack.c.l.b16 %v1116
        %v2218 = vunpack.c.h.b16 %v1116
        %v2219 = vunpack.c.l.b16 %v1117
        %v2220 = vunpack.c.h.b16 %v1117
        %v2221 = vunpack.c.l.b16 %v1118
        %v2222 = vunpack.c.h.b16 %v1118
        %v2223 = vunpack.c.l.b16 %v1119
        %v2224 = vunpack.c.h.b16 %v1119
        %v2225 = vunpack.c.l.b16 %v1120
        %v2226 = vunpack.c.h.b16 %v1120
        %v2227 = vunpack.c.l.b16 %v1121
        %v2228 = vunpack.c.h.b16 %v1121
        %v2229 = vunpack.c.l.b16 %v1122
        %v2230 = vunpack.c.h.b16 %v1122
        %v2231 = vunpack.c.l.b16 %v1123
        %v2232 = vunpack.c.h.b16 %v1123
        %v2233 = vunpack.c.l.b16 %v1124
        %v2234 = vunpack.c.h.b16 %v1124
        %v2235 = vunpack.c.l.b16 %v1125
        %v2236 = vunpack.c.h.b16 %v1125
        %v2237 = vunpack.c.l.b16 %v1126
        %v2238 = vunpack.c.h.b16 %v1126
        %v2239 = vunpack.c.l.b16 %v1127
        %v2240 = vunpack.c.h.b16 %v1127
        %v2241 = vunpack.c.l.b16 %v1128
        %v2242 = vunpack.c.h.b16 %v1128
        %v2243 = vunpack.c.l.b16 %v1129
        %v2244 = vunpack.c.h.b16 %v1129
        %v2245 = vunpack.c.l.b16 %v1130
        %v2246 = vunpack.c.h.b16 %v1130
        %v2247 = vunpack.c.l.b16 %v1131
        %v2248 = vunpack.c.h.b16 %v1131
        %v2249 = vunpack.c.l.b16 %v1132
        %v2250 = vunpack.c.h.b16 %v1132
        %v2251 = vunpack.c.l.b16 %v1133
        %v2252 = vunpack.c.h.b16 %v1133
        %v2253 = vunpack.c.l.b16 %v1134
        %v2254 = vunpack.c.h.b16 %v1134
        %v2255 = vunpack.c.l.b16 %v1135
        %v2256 = vunpack.c.h.b16 %v1135
        %v2257 = vunpack.c.l.b16 %v1136
        %v2258 = vunpack.c.h.b16 %v1136
        %v2259 = vunpack.c.l.b16 %v1137
        %v2260 = vunpack.c.h.b16 %v1137
        %v2261 = vunpack.c.l.b16 %v1138
        %v2262 = vunpack.c.h.b16 %v1138
        %v2263 = vunpack.c.l.b16 %v1139
        %v2264 = vunpack.c.h.b16 %v1139
        %v2265 = vunpack.c.l.b16 %v1140
        %v2266 = vunpack.c.h.b16 %v1140
        %v2267 = vunpack.c.l.b16 %v1141
        %v2268 = vunpack.c.h.b16 %v1141
        %v2269 = vunpack.c.l.b16 %v1142
        %v2270 = vunpack.c.h.b16 %v1142
        %v2271 = vunpack.c.l.b16 %v1143
        %v2272 = vunpack.c.h.b16 %v1143
        %v2273 = vunpack.c.l.b16 %v1144
        %v2274 = vunpack.c.h.b16 %v1144
        %v2275 = vunpack.c.l.b16 %v1145
        %v2276 = vunpack.c.h.b16 %v1145
        %v2277 = vunpack.c.l.b16 %v1146
        %v2278 = vunpack.c.h.b16 %v1146
        %v2279 = vunpack.c.l.b16 %v1147
        %v2280 = vunpack.c.h.b16 %v1147
        %v2281 = vunpack.c.l.b16 %v1148
        %v2282 = vunpack.c.h.b16 %v1148
        %v2283 = vunpack.c.l.b16 %v1149
        %v2284 = vunpack.c.h.b16 %v1149
        %v2285 = vunpack.c.l.b16 %v1150
        %v2286 = vunpack.c.h.b16 %v1150
        %v2287 = vunpack.c.l.b16 %v1151
        %v2288 = vunpack.c.h.b16 %v1151
        %v2289 = vunpack.c.l.b16 %v1152
        %v2290 = vunpack.c.h.b16 %v1152
        %v2291 = vunpack.c.l.b16 %v1153
        %v2292 = vunpack.c.h.b16 %v1153
        %v2293 = vunpack.c.l.b16 %v1154
        %v2294 = vunpack.c.h.b16 %v1154
        %v2295 = vunpack.c.l.b16 %v1155
        %v2296 = vunpack.c.h.b16 %v1155
        %v2297 = vunpack.c.l.b16 %v1156
        %v2298 = vunpack.c.h.b16 %v1156
        %v2299 = vunpack.c.l.b16 %v1157
        %v2300 = vunpack.c.h.b16 %v1157
        %v2301 = vunpack.c.l.b16 %v1158
        %v2302 = vunpack.c.h.b16 %v1158
        %v2303 = vunpack.c.l.b16 %v1159
        %v2304 = vunpack.c.h.b16 %v1159
        %v2305 = vunpack.c.l.b16 %v1160
        %v2306 = vunpack.c.h.b16 %v1160
        %v2307 = vunpack.c.l.b16 %v1161
        %v2308 = vunpack.c.h.b16 %v1161
        %v2309 = vunpack.c.l.b16 %v1162
        %v2310 = vunpack.c.h.b16 %v1162
        %v2311 = vunpack.c.l.b16 %v1163
        %v2312 = vunpack.c.h.b16 %v1163
        %v2313 = vunpack.c.l.b16 %v1164
        %v2314 = vunpack.c.h.b16 %v1164
        %v2315 = vunpack.c.l.b16 %v1165
        %v2316 = vunpack.c.h.b16 %v1165
        %v2317 = vunpack.c.l.b16 %v1166
        %v2318 = vunpack.c.h.b16 %v1166
        %v2319 = vpack.c.b16 %v1553, %v1551
        %v2320 = vpack.c.b16 %v1554, %v1552
        %v2321 = vpack.c.b16 %v1557, %v1555
        %v2322 = vpack.c.b16 %v1558, %v1556
        %v2323 = vpack.c.b16 %v1561, %v1559
        %v2324 = vpack.c.b16 %v1562, %v1560
        %v2325 = vpack.c.b16 %v1565, %v1563
        %v2326 = vpack.c.b16 %v1566, %v1564
        %v2327 = vpack.c.b16 %v1569, %v1567
        %v2328 = vpack.c.b16 %v1570, %v1568
        %v2329 = vpack.c.b16 %v1573, %v1571
        %v2330 = vpack.c.b16 %v1574, %v1572
        %v2331 = vpack.c.b16 %v1577, %v1575
        %v2332 = vpack.c.b16 %v1578, %v1576
        %v2333 = vpack.c.b16 %v1581, %v1579
        %v2334 = vpack.c.b16 %v1582, %v1580
        %v2335 = vpack.c.b16 %v1585, %v1583
        %v2336 = vpack.c.b16 %v1586, %v1584
        %v2337 = vpack.c.b16 %v1589, %v1587
        %v2338 = vpack.c.b16 %v1590, %v1588
        %v2339 = vpack.c.b16 %v1593, %v1591
        %v2340 = vpack.c.b16 %v1594, %v1592
        %v2341 = vpack.c.b16 %v1597, %v1595
        %v2342 = vpack.c.b16 %v1598, %v1596
        %v2343 = vpack.c.b16 %v1601, %v1599
        %v2344 = vpack.c.b16 %v1602, %v1600
        %v2345 = vpack.c.b16 %v1605, %v1603
        %v2346 = vpack.c.b16 %v1606, %v1604
        %v2347 = vpack.c.b16 %v1609, %v1607
        %v2348 = vpack.c.b16 %v1610, %v1608
        %v2349 = vpack.c.b16 %v1613, %v1611
        %v2350 = vpack.c.b16 %v1614, %v1612
        %v2351 = vpack.c.b16 %v1617, %v1615
        %v2352 = vpack.c.b16 %v1618, %v1616
        %v2353 = vpack.c.b16 %v1621, %v1619
        %v2354 = vpack.c.b16 %v1622, %v1620
        %v2355 = vpack.c.b16 %v1625, %v1623
        %v2356 = vpack.c.b16 %v1626, %v1624
        %v2357 = vpack.c.b16 %v1629, %v1627
        %v2358 = vpack.c.b16 %v1630, %v1628
        %v2359 = vpack.c.b16 %v1633, %v1631
        %v2360 = vpack.c.b16 %v1634, %v1632
        %v2361 = vpack.c.b16 %v1637, %v1635
        %v2362 = vpack.c.b16 %v1638, %v1636
        %v2363 = vpack.c.b16 %v1641, %v1639
        %v2364 = vpack.c.b16 %v1642, %v1640
        %v2365 = vpack.c.b16 %v1645, %v1643
        %v2366 = vpack.c.b16 %v1646, %v1644
        %v2367 = vpack.c.b16 %v1649, %v1647
        %v2368 = vpack.c.b16 %v1650, %v1648
        %v2369 = vpack.c.b16 %v1653, %v1651
        %v2370 = vpack.c.b16 %v1654, %v1652
        %v2371 = vpack.c.b16 %v1657, %v1655
        %v2372 = vpack.c.b16 %v1658, %v1656
        %v2373 = vpack.c.b16 %v1661, %v1659
        %v2374 = vpack.c.b16 %v1662, %v1660
        %v2375 = vpack.c.b16 %v1665, %v1663
        %v2376 = vpack.c.b16 %v1666, %v1664
        %v2377 = vpack.c.b16 %v1669, %v1667
        %v2378 = vpack.c.b16 %v1670, %v1668
        %v2379 = vpack.c.b16 %v1673, %v1671
        %v2380 = vpack.c.b16 %v1674, %v1672
        %v2381 = vpack.c.b16 %v1677, %v1675
        %v2382 = vpack.c.b16 %v1678, %v1676
        %v2383 = vpack.c.b16 %v1681, %v1679
        %v2384 = vpack.c.b16 %v1682, %v1680
        %v2385 = vpack.c.b16 %v1685, %v1683
        %v2386 = vpack.c.b16 %v1686, %v1684
        %v2387 = vpack.c.b16 %v1689, %v1687
        %v2388 = vpack.c.b16 %v1690, %v1688
        %v2389 = vpack.c.b16 %v1693, %v1691
        %v2390 = vpack.c.b16 %v1694, %v1692
        %v2391 = vpack.c.b16 %v1697, %v1695
        %v2392 = vpack.c.b16 %v1698, %v1696
        %v2393 = vpack.c.b16 %v1701, %v1699
        %v2394 = vpack.c.b16 %v1702, %v1700
        %v2395 = vpack.c.b16 %v1705, %v1703
        %v2396 = vpack.c.b16 %v1706, %v1704
        %v2397 = vpack.c.b16 %v1709, %v1707
        %v2398 = vpack.c.b16 %v1710, %v1708
        %v2399 = vpack.c.b16 %v1713, %v1711
        %v2400 = vpack.c.b16 %v1714, %v1712
        %v2401 = vpack.c.b16 %v1717, %v1715
        %v2402 = vpack.c.b16 %v1718, %v1716
        %v2403 = vpack.c.b16 %v1721, %v1719
        %v2404 = vpack.c.b16 %v1722, %v1720
        %v2405 = vpack.c.b16 %v1725, %v1723
        %v2406 = vpack.c.b16 %v1726, %v1724
        %v2407 = vpack.c.b16 %v1729, %v1727
        %v2408 = vpack.c.b16 %v1730, %v1728
        %v2409 = vpack.c.b16 %v1733, %v1731
        %v2410 = vpack.c.b16 %v1734, %v1732
        %v2411 = vpack.c.b16 %v1737, %v1735
        %v2412 = vpack.c.b16 %v1738, %v1736
        %v2413 = vpack.c.b16 %v1741, %v1739
        %v2414 = vpack.c.b16 %v1742, %v1740
        %v2415 = vpack.c.b16 %v1745, %v1743
        %v2416 = vpack.c.b16 %v1746, %v1744
        %v2417 = vpack.c.b16 %v1749, %v1747
        %v2418 = vpack.c.b16 %v1750, %v1748
        %v2419 = vpack.c.b16 %v1753, %v1751
        %v2420 = vpack.c.b16 %v1754, %v1752
        %v2421 = vpack.c.b16 %v1757, %v1755
        %v2422 = vpack.c.b16 %v1758, %v1756
        %v2423 = vpack.c.b16 %v1761, %v1759
        %v2424 = vpack.c.b16 %v1762, %v1760
        %v2425 = vpack.c.b16 %v1765, %v1763
        %v2426 = vpack.c.b16 %v1766, %v1764
        %v2427 = vpack.c.b16 %v1769, %v1767
        %v2428 = vpack.c.b16 %v1770, %v1768
        %v2429 = vpack.c.b16 %v1773, %v1771
        %v2430 = vpack.c.b16 %v1774, %v1772
        %v2431 = vpack.c.b16 %v1777, %v1775
        %v2432 = vpack.c.b16 %v1778, %v1776
        %v2433 = vpack.c.b16 %v1781, %v1779
        %v2434 = vpack.c.b16 %v1782, %v1780
        %v2435 = vpack.c.b16 %v1785, %v1783
        %v2436 = vpack.c.b16 %v1786, %v1784
        %v2437 = vpack.c.b16 %v1789, %v1787
        %v2438 = vpack.c.b16 %v1790, %v1788
        %v2439 = vpack.c.b16 %v1793, %v1791
        %v2440 = vpack.c.b16 %v1794, %v1792
        %v2441 = vpack.c.b16 %v1797, %v1795
        %v2442 = vpack.c.b16 %v1798, %v1796
        %v2443 = vpack.c.b16 %v1801, %v1799
        %v2444 = vpack.c.b16 %v1802, %v1800
        %v2445 = vpack.c.b16 %v1805, %v1803
        %v2446 = vpack.c.b16 %v1806, %v1804
        %v2447 = vpack.c.b16 %v1809, %v1807
        %v2448 = vpack.c.b16 %v1810, %v1808
        %v2449 = vpack.c.b16 %v1813, %v1811
        %v2450 = vpack.c.b16 %v1814, %v1812
        %v2451 = vpack.c.b16 %v1817, %v1815
        %v2452 = vpack.c.b16 %v1818, %v1816
        %v2453 = vpack.c.b16 %v1821, %v1819
        %v2454 = vpack.c.b16 %v1822, %v1820
        %v2455 = vpack.c.b16 %v1825, %v1823
        %v2456 = vpack.c.b16 %v1826, %v1824
        %v2457 = vpack.c.b16 %v1829, %v1827
        %v2458 = vpack.c.b16 %v1830, %v1828
        %v2459 = vpack.c.b16 %v1833, %v1831
        %v2460 = vpack.c.b16 %v1834, %v1832
        %v2461 = vpack.c.b16 %v1837, %v1835
        %v2462 = vpack.c.b16 %v1838, %v1836
        %v2463 = vpack.c.b16 %v1841, %v1839
        %v2464 = vpack.c.b16 %v1842, %v1840
        %v2465 = vpack.c.b16 %v1845, %v1843
        %v2466 = vpack.c.b16 %v1846, %v1844
        %v2467 = vpack.c.b16 %v1849, %v1847
        %v2468 = vpack.c.b16 %v1850, %v1848
        %v2469 = vpack.c.b16 %v1853, %v1851
        %v2470 = vpack.c.b16 %v1854, %v1852
        %v2471 = vpack.c.b16 %v1857, %v1855
        %v2472 = vpack.c.b16 %v1858, %v1856
        %v2473 = vpack.c.b16 %v1861, %v1859
        %v2474 = vpack.c.b16 %v1862, %v1860
        %v2475 = vpack.c.b16 %v1865, %v1863
        %v2476 = vpack.c.b16 %v1866, %v1864
        %v2477 = vpack.c.b16 %v1869, %v1867
        %v2478 = vpack.c.b16 %v1870, %v1868
        %v2479 = vpack.c.b16 %v1873, %v1871
        %v2480 = vpack.c.b16 %v1874, %v1872
        %v2481 = vpack.c.b16 %v1877, %v1875
        %v2482 = vpack.c.b16 %v1878, %v1876
        %v2483 = vpack.c.b16 %v1881, %v1879
        %v2484 = vpack.c.b16 %v1882, %v1880
        %v2485 = vpack.c.b16 %v1885, %v1883
        %v2486 = vpack.c.b16 %v1886, %v1884
        %v2487 = vpack.c.b16 %v1889, %v1887
        %v2488 = vpack.c.b16 %v1890, %v1888
        %v2489 = vpack.c.b16 %v1893, %v1891
        %v2490 = vpack.c.b16 %v1894, %v1892
        %v2491 = vpack.c.b16 %v1897, %v1895
        %v2492 = vpack.c.b16 %v1898, %v1896
        %v2493 = vpack.c.b16 %v1901, %v1899
        %v2494 = vpack.c.b16 %v1902, %v1900
        %v2495 = vpack.c.b16 %v1905, %v1903
        %v2496 = vpack.c.b16 %v1906, %v1904
        %v2497 = vpack.c.b16 %v1909, %v1907
        %v2498 = vpack.c.b16 %v1910, %v1908
        %v2499 = vpack.c.b16 %v1913, %v1911
        %v2500 = vpack.c.b16 %v1914, %v1912
        %v2501 = vpack.c.b16 %v1917, %v1915
        %v2502 = vpack.c.b16 %v1918, %v1916
        %v2503 = vpack.c.b16 %v1921, %v1919
        %v2504 = vpack.c.b16 %v1922, %v1920
        %v2505 = vpack.c.b16 %v1925, %v1923
        %v2506 = vpack.c.b16 %v1926, %v1924
        %v2507 = vpack.c.b16 %v1929, %v1927
        %v2508 = vpack.c.b16 %v1930, %v1928
        %v2509 = vpack.c.b16 %v1933, %v1931
        %v2510 = vpack.c.b16 %v1934, %v1932
        %v2511 = vpack.c.b16 %v1937, %v1935
        %v2512 = vpack.c.b16 %v1938, %v1936
        %v2513 = vpack.c.b16 %v1941, %v1939
        %v2514 = vpack.c.b16 %v1942, %v1940
        %v2515 = vpack.c.b16 %v1945, %v1943
        %v2516 = vpack.c.b16 %v1946, %v1944
        %v2517 = vpack.c.b16 %v1949, %v1947
        %v2518 = vpack.c.b16 %v1950, %v1948
        %v2519 = vpack.c.b16 %v1953, %v1951
        %v2520 = vpack.c.b16 %v1954, %v1952
        %v2521 = vpack.c.b16 %v1957, %v1955
        %v2522 = vpack.c.b16 %v1958, %v1956
        %v2523 = vpack.c.b16 %v1961, %v1959
        %v2524 = vpack.c.b16 %v1962, %v1960
        %v2525 = vpack.c.b16 %v1965, %v1963
        %v2526 = vpack.c.b16 %v1966, %v1964
        %v2527 = vpack.c.b16 %v1969, %v1967
        %v2528 = vpack.c.b16 %v1970, %v1968
        %v2529 = vpack.c.b16 %v1973, %v1971
        %v2530 = vpack.c.b16 %v1974, %v1972
        %v2531 = vpack.c.b16 %v1977, %v1975
        %v2532 = vpack.c.b16 %v1978, %v1976
        %v2533 = vpack.c.b16 %v1981, %v1979
        %v2534 = vpack.c.b16 %v1982, %v1980
        %v2535 = vpack.c.b16 %v1985, %v1983
        %v2536 = vpack.c.b16 %v1986, %v1984
        %v2537 = vpack.c.b16 %v1989, %v1987
        %v2538 = vpack.c.b16 %v1990, %v1988
        %v2539 = vpack.c.b16 %v1993, %v1991
        %v2540 = vpack.c.b16 %v1994, %v1992
        %v2541 = vpack.c.b16 %v1997, %v1995
        %v2542 = vpack.c.b16 %v1998, %v1996
        %v2543 = vpack.c.b16 %v2001, %v1999
        %v2544 = vpack.c.b16 %v2002, %v2000
        %v2545 = vpack.c.b16 %v2005, %v2003
        %v2546 = vpack.c.b16 %v2006, %v2004
        %v2547 = vpack.c.b16 %v2009, %v2007
        %v2548 = vpack.c.b16 %v2010, %v2008
        %v2549 = vpack.c.b16 %v2013, %v2011
        %v2550 = vpack.c.b16 %v2014, %v2012
        %v2551 = vpack.c.b16 %v2017, %v2015
        %v2552 = vpack.c.b16 %v2018, %v2016
        %v2553 = vpack.c.b16 %v2021, %v2019
        %v2554 = vpack.c.b16 %v2022, %v2020
        %v2555 = vpack.c.b16 %v2025, %v2023
        %v2556 = vpack.c.b16 %v2026, %v2024
        %v2557 = vpack.c.b16 %v2029, %v2027
        %v2558 = vpack.c.b16 %v2030, %v2028
        %v2559 = vpack.c.b16 %v2033, %v2031
        %v2560 = vpack.c.b16 %v2034, %v2032
        %v2561 = vpack.c.b16 %v2037, %v2035
        %v2562 = vpack.c.b16 %v2038, %v2036
        %v2563 = vpack.c.b16 %v2041, %v2039
        %v2564 = vpack.c.b16 %v2042, %v2040
        %v2565 = vpack.c.b16 %v2045, %v2043
        %v2566 = vpack.c.b16 %v2046, %v2044
        %v2567 = vpack.c.b16 %v2049, %v2047
        %v2568 = vpack.c.b16 %v2050, %v2048
        %v2569 = vpack.c.b16 %v2053, %v2051
        %v2570 = vpack.c.b16 %v2054, %v2052
        %v2571 = vpack.c.b16 %v2057, %v2055
        %v2572 = vpack.c.b16 %v2058, %v2056
        %v2573 = vpack.c.b16 %v2061, %v2059
        %v2574 = vpack.c.b16 %v2062, %v2060
        %v2575 = vpack.c.b16 %v2065, %v2063
        %v2576 = vpack.c.b16 %v2066, %v2064
        %v2577 = vpack.c.b16 %v2069, %v2067
        %v2578 = vpack.c.b16 %v2070, %v2068
        %v2579 = vpack.c.b16 %v2073, %v2071
        %v2580 = vpack.c.b16 %v2074, %v2072
        %v2581 = vpack.c.b16 %v2077, %v2075
        %v2582 = vpack.c.b16 %v2078, %v2076
        %v2583 = vpack.c.b16 %v2081, %v2079
        %v2584 = vpack.c.b16 %v2082, %v2080
        %v2585 = vpack.c.b16 %v2085, %v2083
        %v2586 = vpack.c.b16 %v2086, %v2084
        %v2587 = vpack.c.b16 %v2089, %v2087
        %v2588 = vpack.c.b16 %v2090, %v2088
        %v2589 = vpack.c.b16 %v2093, %v2091
        %v2590 = vpack.c.b16 %v2094, %v2092
        %v2591 = vpack.c.b16 %v2097, %v2095
        %v2592 = vpack.c.b16 %v2098, %v2096
        %v2593 = vpack.c.b16 %v2101, %v2099
        %v2594 = vpack.c.b16 %v2102, %v2100
        %v2595 = vpack.c.b16 %v2105, %v2103
        %v2596 = vpack.c.b16 %v2106, %v2104
        %v2597 = vpack.c.b16 %v2109, %v2107
        %v2598 = vpack.c.b16 %v2110, %v2108
        %v2599 = vpack.c.b16 %v2113, %v2111
        %v2600 = vpack.c.b16 %v2114, %v2112
        %v2601 = vpack.c.b16 %v2117, %v2115
        %v2602 = vpack.c.b16 %v2118, %v2116
        %v2603 = vpack.c.b16 %v2121, %v2119
        %v2604 = vpack.c.b16 %v2122, %v2120
        %v2605 = vpack.c.b16 %v2125, %v2123
        %v2606 = vpack.c.b16 %v2126, %v2124
        %v2607 = vpack.c.b16 %v2129, %v2127
        %v2608 = vpack.c.b16 %v2130, %v2128
        %v2609 = vpack.c.b16 %v2133, %v2131
        %v2610 = vpack.c.b16 %v2134, %v2132
        %v2611 = vpack.c.b16 %v2137, %v2135
        %v2612 = vpack.c.b16 %v2138, %v2136
        %v2613 = vpack.c.b16 %v2141, %v2139
        %v2614 = vpack.c.b16 %v2142, %v2140
        %v2615 = vpack.c.b16 %v2145, %v2143
        %v2616 = vpack.c.b16 %v2146, %v2144
        %v2617 = vpack.c.b16 %v2149, %v2147
        %v2618 = vpack.c.b16 %v2150, %v2148
        %v2619 = vpack.c.b16 %v2153, %v2151
        %v2620 = vpack.c.b16 %v2154, %v2152
        %v2621 = vpack.c.b16 %v2157, %v2155
        %v2622 = vpack.c.b16 %v2158, %v2156
        %v2623 = vpack.c.b16 %v2161, %v2159
        %v2624 = vpack.c.b16 %v2162, %v2160
        %v2625 = vpack.c.b16 %v2165, %v2163
        %v2626 = vpack.c.b16 %v2166, %v2164
        %v2627 = vpack.c.b16 %v2169, %v2167
        %v2628 = vpack.c.b16 %v2170, %v2168
        %v2629 = vpack.c.b16 %v2173, %v2171
        %v2630 = vpack.c.b16 %v2174, %v2172
        %v2631 = vpack.c.b16 %v2177, %v2175
        %v2632 = vpack.c.b16 %v2178, %v2176
        %v2633 = vpack.c.b16 %v2181, %v2179
        %v2634 = vpack.c.b16 %v2182, %v2180
        %v2635 = vpack.c.b16 %v2185, %v2183
        %v2636 = vpack.c.b16 %v2186, %v2184
        %v2637 = vpack.c.b16 %v2189, %v2187
        %v2638 = vpack.c.b16 %v2190, %v2188
        %v2639 = vpack.c.b16 %v2193, %v2191
        %v2640 = vpack.c.b16 %v2194, %v2192
        %v2641 = vpack.c.b16 %v2197, %v2195
        %v2642 = vpack.c.b16 %v2198, %v2196
        %v2643 = vpack.c.b16 %v2201, %v2199
        %v2644 = vpack.c.b16 %v2202, %v2200
        %v2645 = vpack.c.b16 %v2205, %v2203
        %v2646 = vpack.c.b16 %v2206, %v2204
        %v2647 = vpack.c.b16 %v2209, %v2207
        %v2648 = vpack.c.b16 %v2210, %v2208
        %v2649 = vpack.c.b16 %v2213, %v2211
        %v2650 = vpack.c.b16 %v2214, %v2212
        %v2651 = vpack.c.b16 %v2217, %v2215
        %v2652 = vpack.c.b16 %v2218, %v2216
        %v2653 = vpack.c.b16 %v2221, %v2219
        %v2654 = vpack.c.b16 %v2222, %v2220
        %v2655 = vpack.c.b16 %v2225, %v2223
        %v2656 = vpack.c.b16 %v2226, %v2224
        %v2657 = vpack.c.b16 %v2229, %v2227
        %v2658 = vpack.c.b16 %v2230, %v2228
        %v2659 = vpack.c.b16 %v2233, %v2231
        %v2660 = vpack.c.b16 %v2234, %v2232
        %v2661 = vpack.c.b16 %v2237, %v2235
        %v2662 = vpack.c.b16 %v2238, %v2236
        %v2663 = vpack.c.b16 %v2241, %v2239
        %v2664 = vpack.c.b16 %v2242, %v2240
        %v2665 = vpack.c.b16 %v2245, %v2243
        %v2666 = vpack.c.b16 %v2246, %v2244
        %v2667 = vpack.c.b16 %v2249, %v2247
        %v2668 = vpack.c.b16 %v2250, %v2248
        %v2669 = vpack.c.b16 %v2253, %v2251
        %v2670 = vpack.c.b16 %v2254, %v2252
        %v2671 = vpack.c.b16 %v2257, %v2255
        %v2672 = vpack.c.b16 %v2258, %v2256
        %v2673 = vpack.c.b16 %v2261, %v2259
        %v2674 = vpack.c.b16 %v2262, %v2260
        %v2675 = vpack.c.b16 %v2265, %v2263
        %v2676 = vpack.c.b16 %v2266, %v2264
        %v2677 = vpack.c.b16 %v2269, %v2267
        %v2678 = vpack.c.b16 %v2270, %v2268
        %v2679 = vpack.c.b16 %v2273, %v2271
        %v2680 = vpack.c.b16 %v2274, %v2272
        %v2681 = vpack.c.b16 %v2277, %v2275
        %v2682 = vpack.c.b16 %v2278, %v2276
        %v2683 = vpack.c.b16 %v2281, %v2279
        %v2684 = vpack.c.b16 %v2282, %v2280
        %v2685 = vpack.c.b16 %v2285, %v2283
        %v2686 = vpack.c.b16 %v2286, %v2284
        %v2687 = vpack.c.b16 %v2289, %v2287
        %v2688 = vpack.c.b16 %v2290, %v2288
        %v2689 = vpack.c.b16 %v2293, %v2291
        %v2690 = vpack.c.b16 %v2294, %v2292
        %v2691 = vpack.c.b16 %v2297, %v2295
        %v2692 = vpack.c.b16 %v2298, %v2296
        %v2693 = vpack.c.b16 %v2301, %v2299
        %v2694 = vpack.c.b16 %v2302, %v2300
        %v2695 = vpack.c.b16 %v2305, %v2303
        %v2696 = vpack.c.b16 %v2306, %v2304
        %v2697 = vpack.c.b16 %v2309, %v2307
        %v2698 = vpack.c.b16 %v2310, %v2308
        %v2699 = vpack.c.b16 %v2313, %v2311
        %v2700 = vpack.c.b16 %v2314, %v2312
        %v2701 = vpack.c.b16 %v2317, %v2315
        %v2702 = vpack.c.b16 %v2318, %v2316
        %3087 = vmatprep.subr.bf16.mxu0 %v2334
        %3088 = vmatpush1.bf16.msra.mxu0 %v2333
        %3089 = vmatprep.subr.bf16.mxu0 %v2332
        %3090 = vmatpush1.bf16.msra.mxu0 %v2331
        %3091 = vmatprep.subr.bf16.mxu0 %v2330
        %3092 = vmatpush1.bf16.msra.mxu0 %v2329
        %3093 = vmatprep.subr.bf16.mxu0 %v2328
        %3094 = vmatpush1.bf16.msra.mxu0 %v2327
        %3095 = vmatprep.subr.bf16.mxu0 %v2326
        %3096 = vmatpush1.bf16.msra.mxu0 %v2325
        %3097 = vmatprep.subr.bf16.mxu0 %v2324
        %3098 = vmatpush1.bf16.msra.mxu0 %v2323
        %3099 = vmatprep.subr.bf16.mxu0 %v2322
        %3100 = vmatpush1.bf16.msra.mxu0 %v2321
        %3101 = vmatprep.subr.bf16.mxu0 %v2320
        %3102 = vmatpush1.bf16.msra.mxu0 %v2319
        %3103 = vmatprep.subr.bf16.mxu0 %v2350
        %3104 = vmatpush2.bf16.msra.mxu0 %v2349
        %3105 = vmatprep.subr.bf16.mxu0 %v2348
        %3106 = vmatpush2.bf16.msra.mxu0 %v2347
        %3107 = vmatprep.subr.bf16.mxu0 %v2346
        %3108 = vmatpush2.bf16.msra.mxu0 %v2345
        %3109 = vmatprep.subr.bf16.mxu0 %v2344
        %3110 = vmatpush2.bf16.msra.mxu0 %v2343
        %3111 = vmatprep.subr.bf16.mxu0 %v2342
        %3112 = vmatpush2.bf16.msra.mxu0 %v2341
        %3113 = vmatprep.subr.bf16.mxu0 %v2340
        %3114 = vmatpush2.bf16.msra.mxu0 %v2339
        %3115 = vmatprep.subr.bf16.mxu0 %v2338
        %3116 = vmatpush2.bf16.msra.mxu0 %v2337
        %3117 = vmatprep.subr.bf16.mxu0 %v2336
        %3118 = vmatpush2.bf16.msra.mxu0 %v2335
        %3119 = vmatprep.mubr.bf16.mxu0 %v760
        %3120 = vmatmul.mubr.bf16.gmra.mxu0 %v759
        %v3121 = vpop.f32.mrf.mxu0
        %v3122 = vadd.f32 0.0, %v3121
        %v3123 = vpop.f32.mrf.mxu0
        %v3124 = vadd.f32 0.0, %v3123
        %v3125 = vpop.f32.mrf.mxu0
        %v3126 = vpop.f32.mrf.mxu0
        %3127 = vdwg.mxu0
        %3128 = vmatprep.subr.bf16.mxu0 %v2366
        %3129 = vmatpush1.bf16.msra.mxu0 %v2365
        %3130 = vmatprep.subr.bf16.mxu0 %v2364
        %3131 = vmatpush1.bf16.msra.mxu0 %v2363
        %3132 = vmatprep.subr.bf16.mxu0 %v2362
        %3133 = vmatpush1.bf16.msra.mxu0 %v2361
        %3134 = vmatprep.subr.bf16.mxu0 %v2360
        %3135 = vmatpush1.bf16.msra.mxu0 %v2359
        %3136 = vmatprep.subr.bf16.mxu0 %v2358
        %3137 = vmatpush1.bf16.msra.mxu0 %v2357
        %3138 = vmatprep.subr.bf16.mxu0 %v2356
        %3139 = vmatpush1.bf16.msra.mxu0 %v2355
        %3140 = vmatprep.subr.bf16.mxu0 %v2354
        %3141 = vmatpush1.bf16.msra.mxu0 %v2353
        %3142 = vmatprep.subr.bf16.mxu0 %v2352
        %3143 = vmatpush1.bf16.msra.mxu0 %v2351
        %3144 = vmatprep.subr.bf16.mxu0 %v2382
        %3145 = vmatpush2.bf16.msra.mxu0 %v2381
        %3146 = vmatprep.subr.bf16.mxu0 %v2380
        %3147 = vmatpush2.bf16.msra.mxu0 %v2379
        %3148 = vmatprep.subr.bf16.mxu0 %v2378
        %3149 = vmatpush2.bf16.msra.mxu0 %v2377
        %3150 = vmatprep.subr.bf16.mxu0 %v2376
        %3151 = vmatpush2.bf16.msra.mxu0 %v2375
        %3152 = vmatprep.subr.bf16.mxu0 %v2374
        %3153 = vmatpush2.bf16.msra.mxu0 %v2373
        %3154 = vmatprep.subr.bf16.mxu0 %v2372
        %3155 = vmatpush2.bf16.msra.mxu0 %v2371
        %3156 = vmatprep.subr.bf16.mxu0 %v2370
        %3157 = vmatpush2.bf16.msra.mxu0 %v2369
        %3158 = vmatprep.subr.bf16.mxu0 %v2368
        %3159 = vmatpush2.bf16.msra.mxu0 %v2367
        %3160 = vmatprep.mubr.bf16.mxu0 %v762
        %3161 = vmatmul.mubr.bf16.gmra.mxu0 %v761
        %v3162 = vpop.f32.mrf.mxu0
        %v3163 = vadd.f32 %v3122, %v3162
        %v3164 = vpop.f32.mrf.mxu0
        %v3165 = vadd.f32 %v3124, %v3164
        %v3166 = vpop.f32.mrf.mxu0
        %v3167 = vpop.f32.mrf.mxu0
        %3168 = vdwg.mxu0
        %3169 = vmatprep.subr.bf16.mxu0 %v2398
        %3170 = vmatpush1.bf16.msra.mxu0 %v2397
        %3171 = vmatprep.subr.bf16.mxu0 %v2396
        %3172 = vmatpush1.bf16.msra.mxu0 %v2395
        %3173 = vmatprep.subr.bf16.mxu0 %v2394
        %3174 = vmatpush1.bf16.msra.mxu0 %v2393
        %3175 = vmatprep.subr.bf16.mxu0 %v2392
        %3176 = vmatpush1.bf16.msra.mxu0 %v2391
        %3177 = vmatprep.subr.bf16.mxu0 %v2390
        %3178 = vmatpush1.bf16.msra.mxu0 %v2389
        %3179 = vmatprep.subr.bf16.mxu0 %v2388
        %3180 = vmatpush1.bf16.msra.mxu0 %v2387
        %3181 = vmatprep.subr.bf16.mxu0 %v2386
        %3182 = vmatpush1.bf16.msra.mxu0 %v2385
        %3183 = vmatprep.subr.bf16.mxu0 %v2384
        %3184 = vmatpush1.bf16.msra.mxu0 %v2383
        %3185 = vmatprep.subr.bf16.mxu0 %v2414
        %3186 = vmatpush2.bf16.msra.mxu0 %v2413
        %3187 = vmatprep.subr.bf16.mxu0 %v2412
        %3188 = vmatpush2.bf16.msra.mxu0 %v2411
        %3189 = vmatprep.subr.bf16.mxu0 %v2410
        %3190 = vmatpush2.bf16.msra.mxu0 %v2409
        %3191 = vmatprep.subr.bf16.mxu0 %v2408
        %3192 = vmatpush2.bf16.msra.mxu0 %v2407
        %3193 = vmatprep.subr.bf16.mxu0 %v2406
        %3194 = vmatpush2.bf16.msra.mxu0 %v2405
        %3195 = vmatprep.subr.bf16.mxu0 %v2404
        %3196 = vmatpush2.bf16.msra.mxu0 %v2403
        %3197 = vmatprep.subr.bf16.mxu0 %v2402
        %3198 = vmatpush2.bf16.msra.mxu0 %v2401
        %3199 = vmatprep.subr.bf16.mxu0 %v2400
        %3200 = vmatpush2.bf16.msra.mxu0 %v2399
        %3201 = vmatprep.mubr.bf16.mxu0 %v764
        %3202 = vmatmul.mubr.bf16.gmra.mxu0 %v763
        %v3203 = vpop.f32.mrf.mxu0
        %v3204 = vadd.f32 %v3163, %v3203
        %v3205 = vpop.f32.mrf.mxu0
        %v3206 = vadd.f32 %v3165, %v3205
        %v3207 = vpop.f32.mrf.mxu0
        %v3208 = vpop.f32.mrf.mxu0
        %3209 = vdwg.mxu0
        %3210 = vmatprep.subr.bf16.mxu0 %v2430
        %3211 = vmatpush1.bf16.msra.mxu0 %v2429
        %3212 = vmatprep.subr.bf16.mxu0 %v2428
        %3213 = vmatpush1.bf16.msra.mxu0 %v2427
        %3214 = vmatprep.subr.bf16.mxu0 %v2426
        %3215 = vmatpush1.bf16.msra.mxu0 %v2425
        %3216 = vmatprep.subr.bf16.mxu0 %v2424
        %3217 = vmatpush1.bf16.msra.mxu0 %v2423
        %3218 = vmatprep.subr.bf16.mxu0 %v2422
        %3219 = vmatpush1.bf16.msra.mxu0 %v2421
        %3220 = vmatprep.subr.bf16.mxu0 %v2420
        %3221 = vmatpush1.bf16.msra.mxu0 %v2419
        %3222 = vmatprep.subr.bf16.mxu0 %v2418
        %3223 = vmatpush1.bf16.msra.mxu0 %v2417
        %3224 = vmatprep.subr.bf16.mxu0 %v2416
        %3225 = vmatpush1.bf16.msra.mxu0 %v2415
        %3226 = vmatprep.subr.bf16.mxu0 %v2446
        %3227 = vmatpush2.bf16.msra.mxu0 %v2445
        %3228 = vmatprep.subr.bf16.mxu0 %v2444
        %3229 = vmatpush2.bf16.msra.mxu0 %v2443
        %3230 = vmatprep.subr.bf16.mxu0 %v2442
        %3231 = vmatpush2.bf16.msra.mxu0 %v2441
        %3232 = vmatprep.subr.bf16.mxu0 %v2440
        %3233 = vmatpush2.bf16.msra.mxu0 %v2439
        %3234 = vmatprep.subr.bf16.mxu0 %v2438
        %3235 = vmatpush2.bf16.msra.mxu0 %v2437
        %3236 = vmatprep.subr.bf16.mxu0 %v2436
        %3237 = vmatpush2.bf16.msra.mxu0 %v2435
        %3238 = vmatprep.subr.bf16.mxu0 %v2434
        %3239 = vmatpush2.bf16.msra.mxu0 %v2433
        %3240 = vmatprep.subr.bf16.mxu0 %v2432
        %3241 = vmatpush2.bf16.msra.mxu0 %v2431
        %3242 = vmatprep.mubr.bf16.mxu0 %v766
        %3243 = vmatmul.mubr.bf16.gmra.mxu0 %v765
        %v3244 = vpop.f32.mrf.mxu0
        %v3245 = vadd.f32 %v3204, %v3244
        %v3246 = vpop.f32.mrf.mxu0
        %v3247 = vadd.f32 %v3206, %v3246
        %v3248 = vpop.f32.mrf.mxu0
        %v3249 = vpop.f32.mrf.mxu0
        %3250 = vdwg.mxu0
        %3251 = vmatprep.subr.bf16.mxu0 %v2462
        %3252 = vmatpush1.bf16.msra.mxu0 %v2461
        %3253 = vmatprep.subr.bf16.mxu0 %v2460
        %3254 = vmatpush1.bf16.msra.mxu0 %v2459
        %3255 = vmatprep.subr.bf16.mxu0 %v2458
        %3256 = vmatpush1.bf16.msra.mxu0 %v2457
        %3257 = vmatprep.subr.bf16.mxu0 %v2456
        %3258 = vmatpush1.bf16.msra.mxu0 %v2455
        %3259 = vmatprep.subr.bf16.mxu0 %v2454
        %3260 = vmatpush1.bf16.msra.mxu0 %v2453
        %3261 = vmatprep.subr.bf16.mxu0 %v2452
        %3262 = vmatpush1.bf16.msra.mxu0 %v2451
        %3263 = vmatprep.subr.bf16.mxu0 %v2450
        %3264 = vmatpush1.bf16.msra.mxu0 %v2449
        %3265 = vmatprep.subr.bf16.mxu0 %v2448
        %3266 = vmatpush1.bf16.msra.mxu0 %v2447
        %3267 = vmatprep.subr.bf16.mxu0 %v2478
        %3268 = vmatpush2.bf16.msra.mxu0 %v2477
        %3269 = vmatprep.subr.bf16.mxu0 %v2476
        %3270 = vmatpush2.bf16.msra.mxu0 %v2475
        %3271 = vmatprep.subr.bf16.mxu0 %v2474
        %3272 = vmatpush2.bf16.msra.mxu0 %v2473
        %3273 = vmatprep.subr.bf16.mxu0 %v2472
        %3274 = vmatpush2.bf16.msra.mxu0 %v2471
        %3275 = vmatprep.subr.bf16.mxu0 %v2470
        %3276 = vmatpush2.bf16.msra.mxu0 %v2469
        %3277 = vmatprep.subr.bf16.mxu0 %v2468
        %3278 = vmatpush2.bf16.msra.mxu0 %v2467
        %3279 = vmatprep.subr.bf16.mxu0 %v2466
        %3280 = vmatpush2.bf16.msra.mxu0 %v2465
        %3281 = vmatprep.subr.bf16.mxu0 %v2464
        %3282 = vmatpush2.bf16.msra.mxu0 %v2463
        %3283 = vmatprep.mubr.bf16.mxu0 %v768
        %3284 = vmatmul.mubr.bf16.gmra.mxu0 %v767
        %v3285 = vpop.f32.mrf.mxu0
        %v3286 = vadd.f32 %v3245, %v3285
        %v3287 = vpop.f32.mrf.mxu0
        %v3288 = vadd.f32 %v3247, %v3287
        %v3289 = vpop.f32.mrf.mxu0
        %v3290 = vpop.f32.mrf.mxu0
        %3291 = vdwg.mxu0
        %3292 = vmatprep.subr.bf16.mxu0 %v2494
        %3293 = vmatpush1.bf16.msra.mxu0 %v2493
        %3294 = vmatprep.subr.bf16.mxu0 %v2492
        %3295 = vmatpush1.bf16.msra.mxu0 %v2491
        %3296 = vmatprep.subr.bf16.mxu0 %v2490
        %3297 = vmatpush1.bf16.msra.mxu0 %v2489
        %3298 = vmatprep.subr.bf16.mxu0 %v2488
        %3299 = vmatpush1.bf16.msra.mxu0 %v2487
        %3300 = vmatprep.subr.bf16.mxu0 %v2486
        %3301 = vmatpush1.bf16.msra.mxu0 %v2485
        %3302 = vmatprep.subr.bf16.mxu0 %v2484
        %3303 = vmatpush1.bf16.msra.mxu0 %v2483
        %3304 = vmatprep.subr.bf16.mxu0 %v2482
        %3305 = vmatpush1.bf16.msra.mxu0 %v2481
        %3306 = vmatprep.subr.bf16.mxu0 %v2480
        %3307 = vmatpush1.bf16.msra.mxu0 %v2479
        %3308 = vmatprep.subr.bf16.mxu0 %v2510
        %3309 = vmatpush2.bf16.msra.mxu0 %v2509
        %3310 = vmatprep.subr.bf16.mxu0 %v2508
        %3311 = vmatpush2.bf16.msra.mxu0 %v2507
        %3312 = vmatprep.subr.bf16.mxu0 %v2506
        %3313 = vmatpush2.bf16.msra.mxu0 %v2505
        %3314 = vmatprep.subr.bf16.mxu0 %v2504
        %3315 = vmatpush2.bf16.msra.mxu0 %v2503
        %3316 = vmatprep.subr.bf16.mxu0 %v2502
        %3317 = vmatpush2.bf16.msra.mxu0 %v2501
        %3318 = vmatprep.subr.bf16.mxu0 %v2500
        %3319 = vmatpush2.bf16.msra.mxu0 %v2499
        %3320 = vmatprep.subr.bf16.mxu0 %v2498
        %3321 = vmatpush2.bf16.msra.mxu0 %v2497
        %3322 = vmatprep.subr.bf16.mxu0 %v2496
        %3323 = vmatpush2.bf16.msra.mxu0 %v2495
        %3324 = vmatprep.mubr.bf16.mxu0 %v770
        %3325 = vmatmul.mubr.bf16.gmra.mxu0 %v769
        %v3326 = vpop.f32.mrf.mxu0
        %v3327 = vadd.f32 %v3286, %v3326
        %v3328 = vpop.f32.mrf.mxu0
        %v3329 = vadd.f32 %v3288, %v3328
        %v3330 = vpop.f32.mrf.mxu0
        %v3331 = vpop.f32.mrf.mxu0
        %3332 = vdwg.mxu0
        %3333 = vmatprep.subr.bf16.mxu0 %v2526
        %3334 = vmatpush1.bf16.msra.mxu0 %v2525
        %3335 = vmatprep.subr.bf16.mxu0 %v2524
        %3336 = vmatpush1.bf16.msra.mxu0 %v2523
        %3337 = vmatprep.subr.bf16.mxu0 %v2522
        %3338 = vmatpush1.bf16.msra.mxu0 %v2521
        %3339 = vmatprep.subr.bf16.mxu0 %v2520
        %3340 = vmatpush1.bf16.msra.mxu0 %v2519
        %3341 = vmatprep.subr.bf16.mxu0 %v2518
        %3342 = vmatpush1.bf16.msra.mxu0 %v2517
        %3343 = vmatprep.subr.bf16.mxu0 %v2516
        %3344 = vmatpush1.bf16.msra.mxu0 %v2515
        %3345 = vmatprep.subr.bf16.mxu0 %v2514
        %3346 = vmatpush1.bf16.msra.mxu0 %v2513
        %3347 = vmatprep.subr.bf16.mxu0 %v2512
        %3348 = vmatpush1.bf16.msra.mxu0 %v2511
        %3349 = vmatprep.subr.bf16.mxu0 %v2542
        %3350 = vmatpush2.bf16.msra.mxu0 %v2541
        %3351 = vmatprep.subr.bf16.mxu0 %v2540
        %3352 = vmatpush2.bf16.msra.mxu0 %v2539
        %3353 = vmatprep.subr.bf16.mxu0 %v2538
        %3354 = vmatpush2.bf16.msra.mxu0 %v2537
        %3355 = vmatprep.subr.bf16.mxu0 %v2536
        %3356 = vmatpush2.bf16.msra.mxu0 %v2535
        %3357 = vmatprep.subr.bf16.mxu0 %v2534
        %3358 = vmatpush2.bf16.msra.mxu0 %v2533
        %3359 = vmatprep.subr.bf16.mxu0 %v2532
        %3360 = vmatpush2.bf16.msra.mxu0 %v2531
        %3361 = vmatprep.subr.bf16.mxu0 %v2530
        %3362 = vmatpush2.bf16.msra.mxu0 %v2529
        %3363 = vmatprep.subr.bf16.mxu0 %v2528
        %3364 = vmatpush2.bf16.msra.mxu0 %v2527
        %3365 = vmatprep.mubr.bf16.mxu0 %v772
        %3366 = vmatmul.mubr.bf16.gmra.mxu0 %v771
        %v3367 = vpop.f32.mrf.mxu0
        %v3368 = vadd.f32 %v3327, %v3367
        %v3369 = vpop.f32.mrf.mxu0
        %v3370 = vadd.f32 %v3329, %v3369
        %v3371 = vpop.f32.mrf.mxu0
        %v3372 = vpop.f32.mrf.mxu0
        %3373 = vdwg.mxu0
        %3374 = vmatprep.subr.bf16.mxu0 %v2558
        %3375 = vmatpush1.bf16.msra.mxu0 %v2557
        %3376 = vmatprep.subr.bf16.mxu0 %v2556
        %3377 = vmatpush1.bf16.msra.mxu0 %v2555
        %3378 = vmatprep.subr.bf16.mxu0 %v2554
        %3379 = vmatpush1.bf16.msra.mxu0 %v2553
        %3380 = vmatprep.subr.bf16.mxu0 %v2552
        %3381 = vmatpush1.bf16.msra.mxu0 %v2551
        %3382 = vmatprep.subr.bf16.mxu0 %v2550
        %3383 = vmatpush1.bf16.msra.mxu0 %v2549
        %3384 = vmatprep.subr.bf16.mxu0 %v2548
        %3385 = vmatpush1.bf16.msra.mxu0 %v2547
        %3386 = vmatprep.subr.bf16.mxu0 %v2546
        %3387 = vmatpush1.bf16.msra.mxu0 %v2545
        %3388 = vmatprep.subr.bf16.mxu0 %v2544
        %3389 = vmatpush1.bf16.msra.mxu0 %v2543
        %3390 = vmatprep.subr.bf16.mxu0 %v2574
        %3391 = vmatpush2.bf16.msra.mxu0 %v2573
        %3392 = vmatprep.subr.bf16.mxu0 %v2572
        %3393 = vmatpush2.bf16.msra.mxu0 %v2571
        %3394 = vmatprep.subr.bf16.mxu0 %v2570
        %3395 = vmatpush2.bf16.msra.mxu0 %v2569
        %3396 = vmatprep.subr.bf16.mxu0 %v2568
        %3397 = vmatpush2.bf16.msra.mxu0 %v2567
        %3398 = vmatprep.subr.bf16.mxu0 %v2566
        %3399 = vmatpush2.bf16.msra.mxu0 %v2565
        %3400 = vmatprep.subr.bf16.mxu0 %v2564
        %3401 = vmatpush2.bf16.msra.mxu0 %v2563
        %3402 = vmatprep.subr.bf16.mxu0 %v2562
        %3403 = vmatpush2.bf16.msra.mxu0 %v2561
        %3404 = vmatprep.subr.bf16.mxu0 %v2560
        %3405 = vmatpush2.bf16.msra.mxu0 %v2559
        %3406 = vmatprep.mubr.bf16.mxu0 %v774
        %3407 = vmatmul.mubr.bf16.gmra.mxu0 %v773
        %v3408 = vpop.f32.mrf.mxu0
        %v3409 = vadd.f32 %v3368, %v3408
        %v3410 = vpop.f32.mrf.mxu0
        %v3411 = vadd.f32 %v3370, %v3410
        %v3412 = vpop.f32.mrf.mxu0
        %v3413 = vpop.f32.mrf.mxu0
        %3414 = vdwg.mxu0
        %3415 = vmatprep.subr.bf16.mxu0 %v2590
        %3416 = vmatpush1.bf16.msra.mxu0 %v2589
        %3417 = vmatprep.subr.bf16.mxu0 %v2588
        %3418 = vmatpush1.bf16.msra.mxu0 %v2587
        %3419 = vmatprep.subr.bf16.mxu0 %v2586
        %3420 = vmatpush1.bf16.msra.mxu0 %v2585
        %3421 = vmatprep.subr.bf16.mxu0 %v2584
        %3422 = vmatpush1.bf16.msra.mxu0 %v2583
        %3423 = vmatprep.subr.bf16.mxu0 %v2582
        %3424 = vmatpush1.bf16.msra.mxu0 %v2581
        %3425 = vmatprep.subr.bf16.mxu0 %v2580
        %3426 = vmatpush1.bf16.msra.mxu0 %v2579
        %3427 = vmatprep.subr.bf16.mxu0 %v2578
        %3428 = vmatpush1.bf16.msra.mxu0 %v2577
        %3429 = vmatprep.subr.bf16.mxu0 %v2576
        %3430 = vmatpush1.bf16.msra.mxu0 %v2575
        %3431 = vmatprep.subr.bf16.mxu0 %v2606
        %3432 = vmatpush2.bf16.msra.mxu0 %v2605
        %3433 = vmatprep.subr.bf16.mxu0 %v2604
        %3434 = vmatpush2.bf16.msra.mxu0 %v2603
        %3435 = vmatprep.subr.bf16.mxu0 %v2602
        %3436 = vmatpush2.bf16.msra.mxu0 %v2601
        %3437 = vmatprep.subr.bf16.mxu0 %v2600
        %3438 = vmatpush2.bf16.msra.mxu0 %v2599
        %3439 = vmatprep.subr.bf16.mxu0 %v2598
        %3440 = vmatpush2.bf16.msra.mxu0 %v2597
        %3441 = vmatprep.subr.bf16.mxu0 %v2596
        %3442 = vmatpush2.bf16.msra.mxu0 %v2595
        %3443 = vmatprep.subr.bf16.mxu0 %v2594
        %3444 = vmatpush2.bf16.msra.mxu0 %v2593
        %3445 = vmatprep.subr.bf16.mxu0 %v2592
        %3446 = vmatpush2.bf16.msra.mxu0 %v2591
        %3447 = vmatprep.mubr.bf16.mxu0 %v776
        %3448 = vmatmul.mubr.bf16.gmra.mxu0 %v775
        %v3449 = vpop.f32.mrf.mxu0
        %v3450 = vadd.f32 %v3409, %v3449
        %v3451 = vpop.f32.mrf.mxu0
        %v3452 = vadd.f32 %v3411, %v3451
        %v3453 = vpop.f32.mrf.mxu0
        %v3454 = vpop.f32.mrf.mxu0
        %3455 = vdwg.mxu0
        %3456 = vmatprep.subr.bf16.mxu0 %v2622
        %3457 = vmatpush1.bf16.msra.mxu0 %v2621
        %3458 = vmatprep.subr.bf16.mxu0 %v2620
        %3459 = vmatpush1.bf16.msra.mxu0 %v2619
        %3460 = vmatprep.subr.bf16.mxu0 %v2618
        %3461 = vmatpush1.bf16.msra.mxu0 %v2617
        %3462 = vmatprep.subr.bf16.mxu0 %v2616
        %3463 = vmatpush1.bf16.msra.mxu0 %v2615
        %3464 = vmatprep.subr.bf16.mxu0 %v2614
        %3465 = vmatpush1.bf16.msra.mxu0 %v2613
        %3466 = vmatprep.subr.bf16.mxu0 %v2612
        %3467 = vmatpush1.bf16.msra.mxu0 %v2611
        %3468 = vmatprep.subr.bf16.mxu0 %v2610
        %3469 = vmatpush1.bf16.msra.mxu0 %v2609
        %3470 = vmatprep.subr.bf16.mxu0 %v2608
        %3471 = vmatpush1.bf16.msra.mxu0 %v2607
        %3472 = vmatprep.subr.bf16.mxu0 %v2638
        %3473 = vmatpush2.bf16.msra.mxu0 %v2637
        %3474 = vmatprep.subr.bf16.mxu0 %v2636
        %3475 = vmatpush2.bf16.msra.mxu0 %v2635
        %3476 = vmatprep.subr.bf16.mxu0 %v2634
        %3477 = vmatpush2.bf16.msra.mxu0 %v2633
        %3478 = vmatprep.subr.bf16.mxu0 %v2632
        %3479 = vmatpush2.bf16.msra.mxu0 %v2631
        %3480 = vmatprep.subr.bf16.mxu0 %v2630
        %3481 = vmatpush2.bf16.msra.mxu0 %v2629
        %3482 = vmatprep.subr.bf16.mxu0 %v2628
        %3483 = vmatpush2.bf16.msra.mxu0 %v2627
        %3484 = vmatprep.subr.bf16.mxu0 %v2626
        %3485 = vmatpush2.bf16.msra.mxu0 %v2625
        %3486 = vmatprep.subr.bf16.mxu0 %v2624
        %3487 = vmatpush2.bf16.msra.mxu0 %v2623
        %3488 = vmatprep.mubr.bf16.mxu0 %v778
        %3489 = vmatmul.mubr.bf16.gmra.mxu0 %v777
        %v3490 = vpop.f32.mrf.mxu0
        %v3491 = vadd.f32 %v3450, %v3490
        %v3492 = vpop.f32.mrf.mxu0
        %v3493 = vadd.f32 %v3452, %v3492
        %v3494 = vpop.f32.mrf.mxu0
        %v3495 = vpop.f32.mrf.mxu0
        %3496 = vdwg.mxu0
        %3497 = vmatprep.subr.bf16.mxu0 %v2654
        %3498 = vmatpush1.bf16.msra.mxu0 %v2653
        %3499 = vmatprep.subr.bf16.mxu0 %v2652
        %3500 = vmatpush1.bf16.msra.mxu0 %v2651
        %3501 = vmatprep.subr.bf16.mxu0 %v2650
        %3502 = vmatpush1.bf16.msra.mxu0 %v2649
        %3503 = vmatprep.subr.bf16.mxu0 %v2648
        %3504 = vmatpush1.bf16.msra.mxu0 %v2647
        %3505 = vmatprep.subr.bf16.mxu0 %v2646
        %3506 = vmatpush1.bf16.msra.mxu0 %v2645
        %3507 = vmatprep.subr.bf16.mxu0 %v2644
        %3508 = vmatpush1.bf16.msra.mxu0 %v2643
        %3509 = vmatprep.subr.bf16.mxu0 %v2642
        %3510 = vmatpush1.bf16.msra.mxu0 %v2641
        %3511 = vmatprep.subr.bf16.mxu0 %v2640
        %3512 = vmatpush1.bf16.msra.mxu0 %v2639
        %3513 = vmatprep.subr.bf16.mxu0 %v2670
        %3514 = vmatpush2.bf16.msra.mxu0 %v2669
        %3515 = vmatprep.subr.bf16.mxu0 %v2668
        %3516 = vmatpush2.bf16.msra.mxu0 %v2667
        %3517 = vmatprep.subr.bf16.mxu0 %v2666
        %3518 = vmatpush2.bf16.msra.mxu0 %v2665
        %3519 = vmatprep.subr.bf16.mxu0 %v2664
        %3520 = vmatpush2.bf16.msra.mxu0 %v2663
        %3521 = vmatprep.subr.bf16.mxu0 %v2662
        %3522 = vmatpush2.bf16.msra.mxu0 %v2661
        %3523 = vmatprep.subr.bf16.mxu0 %v2660
        %3524 = vmatpush2.bf16.msra.mxu0 %v2659
        %3525 = vmatprep.subr.bf16.mxu0 %v2658
        %3526 = vmatpush2.bf16.msra.mxu0 %v2657
        %3527 = vmatprep.subr.bf16.mxu0 %v2656
        %3528 = vmatpush2.bf16.msra.mxu0 %v2655
        %3529 = vmatprep.mubr.bf16.mxu0 %v780
        %3530 = vmatmul.mubr.bf16.gmra.mxu0 %v779
        %v3531 = vpop.f32.mrf.mxu0
        %v3532 = vadd.f32 %v3491, %v3531
        %v3533 = vpop.f32.mrf.mxu0
        %v3534 = vadd.f32 %v3493, %v3533
        %v3535 = vpop.f32.mrf.mxu0
        %v3536 = vpop.f32.mrf.mxu0
        %3537 = vdwg.mxu0
        %3538 = vmatprep.subr.bf16.mxu0 %v2686
        %3539 = vmatpush1.bf16.msra.mxu0 %v2685
        %3540 = vmatprep.subr.bf16.mxu0 %v2684
        %3541 = vmatpush1.bf16.msra.mxu0 %v2683
        %3542 = vmatprep.subr.bf16.mxu0 %v2682
        %3543 = vmatpush1.bf16.msra.mxu0 %v2681
        %3544 = vmatprep.subr.bf16.mxu0 %v2680
        %3545 = vmatpush1.bf16.msra.mxu0 %v2679
        %3546 = vmatprep.subr.bf16.mxu0 %v2678
        %3547 = vmatpush1.bf16.msra.mxu0 %v2677
        %3548 = vmatprep.subr.bf16.mxu0 %v2676
        %3549 = vmatpush1.bf16.msra.mxu0 %v2675
        %3550 = vmatprep.subr.bf16.mxu0 %v2674
        %3551 = vmatpush1.bf16.msra.mxu0 %v2673
        %3552 = vmatprep.subr.bf16.mxu0 %v2672
        %3553 = vmatpush1.bf16.msra.mxu0 %v2671
        %3554 = vmatprep.subr.bf16.mxu0 %v2702
        %3555 = vmatpush2.bf16.msra.mxu0 %v2701
        %3556 = vmatprep.subr.bf16.mxu0 %v2700
        %3557 = vmatpush2.bf16.msra.mxu0 %v2699
        %3558 = vmatprep.subr.bf16.mxu0 %v2698
        %3559 = vmatpush2.bf16.msra.mxu0 %v2697
        %3560 = vmatprep.subr.bf16.mxu0 %v2696
        %3561 = vmatpush2.bf16.msra.mxu0 %v2695
        %3562 = vmatprep.subr.bf16.mxu0 %v2694
        %3563 = vmatpush2.bf16.msra.mxu0 %v2693
        %3564 = vmatprep.subr.bf16.mxu0 %v2692
        %3565 = vmatpush2.bf16.msra.mxu0 %v2691
        %3566 = vmatprep.subr.bf16.mxu0 %v2690
        %3567 = vmatpush2.bf16.msra.mxu0 %v2689
        %3568 = vmatprep.subr.bf16.mxu0 %v2688
        %3569 = vmatpush2.bf16.msra.mxu0 %v2687
        %3570 = vmatprep.mubr.bf16.mxu0 %v782
        %3571 = vmatmul.mubr.bf16.gmra.mxu0 %v781
        %v3572 = vpop.f32.mrf.mxu0
        %v3573 = vadd.f32 %v3532, %v3572
        %v3574 = vpop.f32.mrf.mxu0
        %v3575 = vadd.f32 %v3534, %v3574
        %v3576 = vpop.f32.mrf.mxu0
        %v3577 = vpop.f32.mrf.mxu0
        %3578 = vdwg.mxu0
        %v3579 = vpack.c.bf16 %v3573, %v3573
        %v3580 = vpack.c.bf16 %v3575, %v3575
        %v3581 = vld [vmem:[%s2] sm:$0xf]
        %v3582 = vld [vmem:[%s2 + $0x4] sm:$0xf]
        %v3583 = vld [vmem:[%s2 + $0x8] sm:$0xf]
        %v3584 = vld [vmem:[%s2 + $0xc] sm:$0xf]
        %v3585 = vld [vmem:[%s2 + $0x10] sm:$0xf]
        %v3586 = vld [vmem:[%s2 + $0x14] sm:$0xf]
        %v3587 = vld [vmem:[%s2 + $0x18] sm:$0xf]
        %v3588 = vld [vmem:[%s2 + $0x1c] sm:$0xf]
        %v3589 = vld [vmem:[%s2 + $0x20] sm:$0xf]
        %v3590 = vld [vmem:[%s2 + $0x24] sm:$0xf]
        %v3591 = vld [vmem:[%s2 + $0x28] sm:$0xf]
        %v3592 = vld [vmem:[%s2 + $0x2c] sm:$0xf]
        %v3593 = vld [vmem:[%s2 + $0x30] sm:$0xf]
        %v3594 = vld [vmem:[%s2 + $0x34] sm:$0xf]
        %v3595 = vld [vmem:[%s2 + $0x38] sm:$0xf]
        %v3596 = vld [vmem:[%s2 + $0x3c] sm:$0xf]
        %v3597 = vld [vmem:[%s2 + $0x40] sm:$0xf]
        %v3598 = vld [vmem:[%s2 + $0x44] sm:$0xf]
        %v3599 = vld [vmem:[%s2 + $0x48] sm:$0xf]
        %v3600 = vld [vmem:[%s2 + $0x4c] sm:$0xf]
        %v3601 = vld [vmem:[%s2 + $0x50] sm:$0xf]
        %v3602 = vld [vmem:[%s2 + $0x54] sm:$0xf]
        %v3603 = vld [vmem:[%s2 + $0x58] sm:$0xf]
        %v3604 = vld [vmem:[%s2 + $0x5c] sm:$0xf]
        %v3605 = vld [vmem:[%s2 + $0x60] sm:$0xf]
        %v3606 = vld [vmem:[%s2 + $0x64] sm:$0xf]
        %v3607 = vld [vmem:[%s2 + $0x68] sm:$0xf]
        %v3608 = vld [vmem:[%s2 + $0x6c] sm:$0xf]
        %v3609 = vld [vmem:[%s2 + $0x70] sm:$0xf]
        %v3610 = vld [vmem:[%s2 + $0x74] sm:$0xf]
        %v3611 = vld [vmem:[%s2 + $0x78] sm:$0xf]
        %v3612 = vld [vmem:[%s2 + $0x7c] sm:$0xf]
        %v3645 = vunpack.c.l.b16 %v3581
        %v3646 = vunpack.c.l.b16 %v3582
        %v3647 = vunpack.c.l.b16 %v3583
        %v3648 = vunpack.c.l.b16 %v3584
        %v3649 = vunpack.c.l.b16 %v3585
        %v3650 = vunpack.c.l.b16 %v3586
        %v3651 = vunpack.c.l.b16 %v3587
        %v3652 = vunpack.c.l.b16 %v3588
        %v3653 = vunpack.c.l.b16 %v3589
        %v3654 = vunpack.c.l.b16 %v3590
        %v3655 = vunpack.c.l.b16 %v3591
        %v3656 = vunpack.c.l.b16 %v3592
        %v3657 = vunpack.c.l.b16 %v3593
        %v3658 = vunpack.c.l.b16 %v3594
        %v3659 = vunpack.c.l.b16 %v3595
        %v3660 = vunpack.c.l.b16 %v3596
        %v3661 = vunpack.c.l.b16 %v3597
        %v3662 = vunpack.c.l.b16 %v3598
        %v3663 = vunpack.c.l.b16 %v3599
        %v3664 = vunpack.c.l.b16 %v3600
        %v3665 = vunpack.c.l.b16 %v3601
        %v3666 = vunpack.c.l.b16 %v3602
        %v3667 = vunpack.c.l.b16 %v3603
        %v3668 = vunpack.c.l.b16 %v3604
        %v3669 = vunpack.c.l.b16 %v3605
        %v3670 = vunpack.c.l.b16 %v3606
        %v3671 = vunpack.c.l.b16 %v3607
        %v3672 = vunpack.c.l.b16 %v3608
        %v3673 = vunpack.c.l.b16 %v3609
        %v3674 = vunpack.c.l.b16 %v3610
        %v3675 = vunpack.c.l.b16 %v3611
        %v3676 = vunpack.c.l.b16 %v3612
        %v3677 = vpack.c.b16 %v3646, %v3645
        %v3678 = vpack.c.b16 %v3648, %v3647
        %v3679 = vpack.c.b16 %v3650, %v3649
        %v3680 = vpack.c.b16 %v3652, %v3651
        %v3681 = vpack.c.b16 %v3654, %v3653
        %v3682 = vpack.c.b16 %v3656, %v3655
        %v3683 = vpack.c.b16 %v3658, %v3657
        %v3684 = vpack.c.b16 %v3660, %v3659
        %v3685 = vpack.c.b16 %v3662, %v3661
        %v3686 = vpack.c.b16 %v3664, %v3663
        %v3687 = vpack.c.b16 %v3666, %v3665
        %v3688 = vpack.c.b16 %v3668, %v3667
        %v3689 = vpack.c.b16 %v3670, %v3669
        %v3690 = vpack.c.b16 %v3672, %v3671
        %v3691 = vpack.c.b16 %v3674, %v3673
        %v3692 = vpack.c.b16 %v3676, %v3675
        %3709 = vmatprep.subr.bf16.mxu0 0
        %3710 = vmatpush1.bf16.msra.mxu0 %v3684
        %3711 = vmatprep.subr.bf16.mxu0 0
        %3712 = vmatpush1.bf16.msra.mxu0 %v3683
        %3713 = vmatprep.subr.bf16.mxu0 0
        %3714 = vmatpush1.bf16.msra.mxu0 %v3682
        %3715 = vmatprep.subr.bf16.mxu0 0
        %3716 = vmatpush1.bf16.msra.mxu0 %v3681
        %3717 = vmatprep.subr.bf16.mxu0 0
        %3718 = vmatpush1.bf16.msra.mxu0 %v3680
        %3719 = vmatprep.subr.bf16.mxu0 0
        %3720 = vmatpush1.bf16.msra.mxu0 %v3679
        %3721 = vmatprep.subr.bf16.mxu0 0
        %3722 = vmatpush1.bf16.msra.mxu0 %v3678
        %3723 = vmatprep.subr.bf16.mxu0 0
        %3724 = vmatpush1.bf16.msra.mxu0 %v3677
        %3725 = vmatprep.subr.bf16.mxu0 0
        %3726 = vmatpush2.bf16.msra.mxu0 %v3692
        %3727 = vmatprep.subr.bf16.mxu0 0
        %3728 = vmatpush2.bf16.msra.mxu0 %v3691
        %3729 = vmatprep.subr.bf16.mxu0 0
        %3730 = vmatpush2.bf16.msra.mxu0 %v3690
        %3731 = vmatprep.subr.bf16.mxu0 0
        %3732 = vmatpush2.bf16.msra.mxu0 %v3689
        %3733 = vmatprep.subr.bf16.mxu0 0
        %3734 = vmatpush2.bf16.msra.mxu0 %v3688
        %3735 = vmatprep.subr.bf16.mxu0 0
        %3736 = vmatpush2.bf16.msra.mxu0 %v3687
        %3737 = vmatprep.subr.bf16.mxu0 0
        %3738 = vmatpush2.bf16.msra.mxu0 %v3686
        %3739 = vmatprep.subr.bf16.mxu0 0
        %3740 = vmatpush2.bf16.msra.mxu0 %v3685
        %3741 = vmatprep.mubr.bf16.mxu0 %v3580
        %3742 = vmatmul.mubr.bf16.gmra.mxu0 %v3579
        %v3743 = vpop.f32.mrf.mxu0
        %v3744 = vadd.f32 0.0, %v3743
        %v3745 = vpop.f32.mrf.mxu0
        %v3746 = vpop.f32.mrf.mxu0
        %v3747 = vpop.f32.mrf.mxu0
        %3748 = vdwg.mxu0
        %3749 = vst [vmem:[%s197] sm:$0x1] %v3744
      $region40: #{rlca_net_forward.1} parent=31 // pred_fallthru
        _
      %p3750 = scmp.lt.s32.totalorder %s18, 1
      %s3751 = scalar_select %p3750, %s18, 1
      %s3752 = scalar_lea.vmem %s3, %s3751
      // Predicated region
      $region41: #{rlca_net_forward.1} parent=31 // pred_check
        %p3753 = pneg %p114
      $region42: #{rlca_net_forward.1} parent=31 // pred_check_branch
        %3755 = sbr.rel (%p3753) target = $region44
      $region43: #{rlca_net_forward.1} parent=31 // pred_region
        _
      $region44: #{rlca_net_forward.1} parent=31 // pred_fallthru
        _
    $region32: #{rlca_net_forward.1} parent=5 // pred_fallthru
      _
    %p3756 = scmp.le.s32.totalorder 2, %s9
    // Predicated region
    $region45: #{rlca_net_forward.1} parent=5 // pred_check
      %p3757 = pneg %p3756
    $region46: #{rlca_net_forward.1} parent=5 // pred_check_branch
      %3759 = sbr.rel (%p3757) target = $region48
    $region47: #{rlca_net_forward.1} parent=5 // pred_region
      %s3760 = ssub.s32 %s9, 2
      // Predicated region
      $region49: #{rlca_net_forward.1} parent=47 // pred_check
        %p3761 = pneg %p120
      $region50: #{rlca_net_forward.1} parent=47 // pred_check_branch
        %3763 = sbr.rel (%p3761) target = $region52
      $region51: #{rlca_net_forward.1} parent=47 // pred_region
        %p3764 = scmp.lt.s32.totalorder %s20, 1
        %s3765 = scalar_select %p3764, %s20, 1
        %s3766 = scalar_lea.vmem %s3, %s3765
      $region52: #{rlca_net_forward.1} parent=47 // pred_fallthru
        _
    $region48: #{rlca_net_forward.1} parent=5 // pred_fallthru
      _
  $region6: #{rlca_net_forward.1} parent=0 // loop_footer
    %s13 = sadd.s32 1, %s9
  $region7: #{rlca_net_forward.1} parent=0 // loop_footer_branch
    %8 = sbr.rel target = $region3
  $region8: #{rlca_net_forward.1} parent=0 // loop_exit
    _

</llo_original>
